<compile_context>
chip_gen: v7x
topology: tpu7x:2x2x1
jax: 0.10.0
libtpu: 0.0.40
codegen_flags: <defaults>
</compile_context>

<pallas_src>
import functools
import math

import jax
import jax.numpy as jnp
from jax.experimental import pallas as pl
from jax.experimental.pallas import tpu as pltpu


def _layernorm(x, gamma, beta, eps=1e-5):
    mean = jnp.mean(x, axis=-1, keepdims=True)
    var = jnp.mean((x - mean) ** 2, axis=-1, keepdims=True)
    return (x - mean) * jax.lax.rsqrt(var + eps) * gamma + beta


def encoder_layer_kernel(x_ref, res_ref, mask_ref,
                         wqkv_ref, bqkv_ref, wo_ref, bo_ref,
                         w1_ref, b1_ref, w2_ref, b2_ref,
                         g1_ref, be1_ref, g2_ref, be2_ref,
                         out_ref, *, nhead):
    f32, bf16 = jnp.float32, jnp.bfloat16
    R, E = x_ref.shape                       # R = block_batch * L rows
    D = out_ref.shape[-1]
    hd = E // nhead

    x_bf = x_ref[...]                        # (R, E) bf16 (cast hoisted to wrapper)

    # fused q/k/v projection: one MXU pass, f32 accumulation.
    # 1/sqrt(hd) is already folded into the Q weight columns / bias (wrapper).
    qkv = jnp.dot(x_bf, wqkv_ref[...], preferred_element_type=f32) + bqkv_ref[...]
    q = qkv[:, 0:E].astype(bf16)
    k = qkv[:, E:2 * E].astype(bf16)
    v = qkv[:, 2 * E:3 * E].astype(bf16)

    mask_bias = mask_ref[...]                # (R, R): 0 same batch, -1e30 otherwise
    wo = wo_ref[...]                         # (E, D) bf16, loaded once

    # Attention over all R rows at once: one masked (R,R) score matmul and one
    # (R,R)x(R,hd) matmul per head; out_proj folded per head so no lane-axis
    # concat of 16-wide head outputs is needed.  Heads stay a short unrolled
    # Python loop (nhead is small).
    attn_acc = None
    for h in range(nhead):
        sl = slice(h * hd, (h + 1) * hd)
        s = jax.lax.dot_general(q[:, sl], k[:, sl],
                                (((1,), (1,)), ((), ())),
                                preferred_element_type=f32)           # (R, R)
        s = s + mask_bias                    # block-diagonal batch mask (finite)
        s = s - jnp.max(s, axis=-1, keepdims=True)
        p = jnp.exp(s)                       # attn dropout = identity (eval)
        p = p * pl.reciprocal(jnp.sum(p, axis=-1, keepdims=True), approx=True)
        o_h = jnp.dot(p.astype(bf16), v[:, sl], preferred_element_type=f32)
        contrib = jnp.dot(o_h.astype(bf16), wo[sl, :], preferred_element_type=f32)
        attn_acc = contrib if attn_acc is None else attn_acc + contrib
    attn_out = attn_acc + bo_ref[...]        # (R, D)

    # residual + norm1 (dropout1 = identity); residual = original src rows (f32)
    y = _layernorm(res_ref[...] + attn_out, g1_ref[...], be1_ref[...])

    # feed-forward: linear1 -> ReLU -> linear2 (inner dropout = identity)
    h1 = jnp.maximum(jnp.dot(y.astype(bf16), w1_ref[...],
                             preferred_element_type=f32) + b1_ref[...], 0.0)
    h2 = jnp.dot(h1.astype(bf16), w2_ref[...],
                 preferred_element_type=f32) + b2_ref[...]

    # residual + norm2 (dropout2 = identity)
    out_ref[...] = _layernorm(y + h2, g2_ref[...], be2_ref[...]).astype(out_ref.dtype)


def transformer_encoder_layer(src, common, params, nhead, block_batch=None):
    """src: (L, N, d_model), common: (L, N, common_dim) -- PyTorch seq-major."""
    f32, bf16 = jnp.float32, jnp.bfloat16
    L, N, D = src.shape
    Dc = common.shape[-1]
    E = D + Dc
    H = nhead
    hd = E // H
    dff = params["w1"].shape[0]

    # ---- generation-aware grid / block sizing -------------------------------
    # Fill >=256 MXU rows per step (v6e/v7x 2x256 MXU; also >= v5e's 128), cap
    # rows so the per-head (rows x rows) f32 scores stay small vs. VMEM, use a
    # single step when the whole batch fits (grid steps are serial on single-TC
    # v5e/v6e), and split back to two "parallel" steps only when each half still
    # holds >=256 rows so v7x's 2 TensorCores both get work.
    if block_batch is None:
        rows_target, rows_cap = 256, 1024
        bb = -(-rows_target // L)                       # ceil(256 / L)
        bb = max(1, min(bb, max(1, rows_cap // L)))
        bb = max(8, ((bb + 7) // 8) * 8)                # sublane-aligned blocks
        if bb >= N:
            bb = N                                      # one step covers the batch
        block_batch = bb
    Np = -(-N // block_batch) * block_batch             # pad batch to block multiple
    G = Np // block_batch
    if G == 1 and block_batch % 16 == 0 and block_batch * L >= 512:
        block_batch //= 2                               # one step per v7x TensorCore
        G = 2
    R = block_batch * L                                 # MXU M rows per grid step

    # ---- one-time weight prep (constant folding, transposes, bf16 casts) ----
    scale = 1.0 / math.sqrt(hd)                         # folded into Q weight/bias
    wq, wk, wv = (params["wqkv"][0:E], params["wqkv"][E:2 * E],
                  params["wqkv"][2 * E:3 * E])
    wqkv_t = jnp.concatenate([wq.T * scale, wk.T, wv.T], axis=1).astype(bf16)
    bqkv = jnp.concatenate([params["bqkv"][0:E] * scale,
                            params["bqkv"][E:]], axis=0).astype(f32)

    # ---- hoisted layout work: concat, flatten to rows, bf16 cast, padding ----
    x = jnp.concatenate([src, common], axis=-1)                     # (L, N, E)
    x = jnp.transpose(x, (1, 0, 2)).reshape(N * L, E).astype(bf16)  # (N*L, E) bf16
    res = jnp.transpose(src, (1, 0, 2)).reshape(N * L, D).astype(f32)
    if Np != N:
        pad = ((0, (Np - N) * L), (0, 0))
        x = jnp.pad(x, pad)
        res = jnp.pad(res, pad)

    # block-diagonal batch mask bias, identical for every grid step (batch
    # boundaries align with block boundaries) -> computed once, replicated.
    row_bid = jnp.arange(R, dtype=jnp.int32) // L
    mask_bias = jnp.where(row_bid[:, None] == row_bid[None, :],
                          0.0, -1e30).astype(f32)                   # (R, R)

    operands = (
        x, res, mask_bias,
        wqkv_t, bqkv.reshape(1, -1),
        params["wo"].T.astype(bf16), params["bo"].reshape(1, -1).astype(f32),
        params["w1"].T.astype(bf16), params["b1"].reshape(1, -1).astype(f32),
        params["w2"].T.astype(bf16), params["b2"].reshape(1, -1).astype(f32),
        params["g1"].reshape(1, -1).astype(f32), params["be1"].reshape(1, -1).astype(f32),
        params["g2"].reshape(1, -1).astype(f32), params["be2"].reshape(1, -1).astype(f32),
    )

    def replicated(a):
        zeros = (0,) * a.ndim
        return pl.BlockSpec(a.shape, lambda b, _z=zeros: _z)

    in_specs = ([pl.BlockSpec((R, E), lambda b: (b, 0)),
                 pl.BlockSpec((R, D), lambda b: (b, 0))]
                + [replicated(a) for a in operands[2:]])

    grid_spec = pltpu.PrefetchScalarGridSpec(
        num_scalar_prefetch=0,
        grid=(G,),
        in_specs=in_specs,
        out_specs=pl.BlockSpec((R, D), lambda b: (b, 0)),
    )

    flops = G * (2 * R * E * 3 * E          # fused qkv projection
                 + 4 * R * R * E            # per-head scores + P@V over all rows
                 + 2 * R * E * D            # out_proj (folded per head)
                 + 4 * R * D * dff)         # FFN
    bytes_accessed = (sum(int(o.size) * o.dtype.itemsize for o in operands)
                      + Np * L * D * 4)
    cost = pl.CostEstimate(flops=int(flops),
                           transcendentals=int(G * H * R * R),
                           bytes_accessed=int(bytes_accessed))

    out = pl.pallas_call(
        functools.partial(encoder_layer_kernel, nhead=nhead),
        out_shape=jax.ShapeDtypeStruct((Np * L, D), f32),
        grid_spec=grid_spec,
        compiler_params=pltpu.CompilerParams(
            dimension_semantics=("parallel",),
            vmem_limit_bytes=32 * 1024 * 1024),
        cost_estimate=cost,
    )(*operands)

    out = out[:N * L].reshape(N, L, D)
    return jnp.transpose(out, (1, 0, 2))                 # back to (L, N, D)


def reference(src, common, params, nhead):
    """Pure-JAX f32 reference mirroring PyTorch F.multi_head_attention_forward."""
    x = jnp.concatenate([src, common], axis=-1)          # (L, N, E)
    L, N, E = x.shape
    hd = E // nhead
    wqkv, bqkv = params["wqkv"], params["bqkv"]
    q = (x @ wqkv[:E].T + bqkv[:E]) * (hd ** -0.5)
    k = x @ wqkv[E:2 * E].T + bqkv[E:2 * E]
    v = x @ wqkv[2 * E:].T + bqkv[2 * E:]

    def split(t):
        return t.reshape(L, N, nhead, hd).transpose(1, 2, 0, 3)   # (N, H, L, hd)

    qh, kh, vh = split(q), split(k), split(v)
    scores = jnp.einsum("nhld,nhmd->nhlm", qh, kh)
    probs = jax.nn.softmax(scores, axis=-1)
    o = jnp.einsum("nhlm,nhmd->nhld", probs, vh)
    o = o.transpose(2, 0, 1, 3).reshape(L, N, E)
    attn_out = o @ params["wo"].T + params["bo"]

    def ln(t, g, b, eps=1e-5):
        m = t.mean(-1, keepdims=True)
        var = ((t - m) ** 2).mean(-1, keepdims=True)
        return (t - m) / jnp.sqrt(var + eps) * g + b

    y = ln(src + attn_out, params["g1"], params["be1"])
    h1 = jax.nn.relu(y @ params["w1"].T + params["b1"])
    h2 = h1 @ params["w2"].T + params["b2"]
    return ln(y + h2, params["g2"], params["be2"])


if __name__ == "__main__":
    # Small shapes consistent with the module's forward:
    L, N = 8, 8                 # seq_len, batch
    d_model = 32                # src feature dim (and output dim)
    common_dim = 32             # common_input feature dim
    E = d_model + common_dim    # encoder_input_dim (attention embed dim)
    nhead = 4
    dff = 64                    # dim_feedforward (small for the demo)

    ks = jax.random.split(jax.random.PRNGKey(0), 14)
    params = {
        "wqkv": 0.05 * jax.random.normal(ks[0], (3 * E, E), jnp.float32),
        "bqkv": 0.05 * jax.random.normal(ks[1], (3 * E,), jnp.float32),
        "wo":   0.05 * jax.random.normal(ks[2], (d_model, E), jnp.float32),
        "bo":   0.05 * jax.random.normal(ks[3], (d_model,), jnp.float32),
        "w1":   0.05 * jax.random.normal(ks[4], (dff, d_model), jnp.float32),
        "b1":   0.05 * jax.random.normal(ks[5], (dff,), jnp.float32),
        "w2":   0.05 * jax.random.normal(ks[6], (d_model, dff), jnp.float32),
        "b2":   0.05 * jax.random.normal(ks[7], (d_model,), jnp.float32),
        "g1":   1.0 + 0.1 * jax.random.normal(ks[8], (d_model,), jnp.float32),
        "be1":  0.1 * jax.random.normal(ks[9], (d_model,), jnp.float32),
        "g2":   1.0 + 0.1 * jax.random.normal(ks[10], (d_model,), jnp.float32),
        "be2":  0.1 * jax.random.normal(ks[11], (d_model,), jnp.float32),
    }

    src = jax.random.normal(ks[12], (L, N, d_model), jnp.float32)
    common_input = jax.random.normal(ks[13], (L, N, common_dim), jnp.float32)

    out = transformer_encoder_layer(src, common_input, params, nhead)
    out = jax.block_until_ready(out)

    with jax.default_matmul_precision("highest"):
        ref = reference(src, common_input, params, nhead)
    ref = jax.block_until_ready(ref)

    assert out.shape == (L, N, d_model)
    max_err = float(jnp.max(jnp.abs(out - ref)))
    # bf16 matmul operands with f32 accumulation vs. f32-HIGHEST reference
    assert jnp.allclose(out, ref, atol=2e-2, rtol=2e-2), max_err
    print("KERNEL_OK")
</pallas_src>

<mosaic_0001>
module attributes {stable_mosaic.version = 11 : i64} {
  func.func @encoder_layer_kernel(%arg0: i32, %arg1: memref<64x64xbf16, #tpu.memory_space<vmem>>, %arg2: memref<64x32xf32, #tpu.memory_space<vmem>>, %arg3: memref<64x64xf32, #tpu.memory_space<vmem>>, %arg4: memref<64x192xbf16, #tpu.memory_space<vmem>>, %arg5: memref<1x192xf32, #tpu.memory_space<vmem>>, %arg6: memref<64x32xbf16, #tpu.memory_space<vmem>>, %arg7: memref<1x32xf32, #tpu.memory_space<vmem>>, %arg8: memref<32x64xbf16, #tpu.memory_space<vmem>>, %arg9: memref<1x64xf32, #tpu.memory_space<vmem>>, %arg10: memref<64x32xbf16, #tpu.memory_space<vmem>>, %arg11: memref<1x32xf32, #tpu.memory_space<vmem>>, %arg12: memref<1x32xf32, #tpu.memory_space<vmem>>, %arg13: memref<1x32xf32, #tpu.memory_space<vmem>>, %arg14: memref<1x32xf32, #tpu.memory_space<vmem>>, %arg15: memref<1x32xf32, #tpu.memory_space<vmem>>, %arg16: memref<64x32xf32, #tpu.memory_space<vmem>>) attributes {dimension_semantics = [#tpu.dimension_semantics<parallel>], iteration_bounds = array<i64: 1>, scalar_prefetch = 0 : i64, scratch_operands = 0 : i64, tpu.core_type = #tpu.core_type<tc>, window_params = [{transform_indices = @transform_0, window_bounds = array<i64: 64, 64>}, {transform_indices = @transform_1, window_bounds = array<i64: 64, 32>}, {pipeline_mode = #tpu.pipeline_mode<synchronous>, transform_indices = @transform_2, window_bounds = array<i64: 64, 64>}, {pipeline_mode = #tpu.pipeline_mode<synchronous>, transform_indices = @transform_3, window_bounds = array<i64: 64, 192>}, {pipeline_mode = #tpu.pipeline_mode<synchronous>, transform_indices = @transform_4, window_bounds = array<i64: 1, 192>}, {pipeline_mode = #tpu.pipeline_mode<synchronous>, transform_indices = @transform_5, window_bounds = array<i64: 64, 32>}, {pipeline_mode = #tpu.pipeline_mode<synchronous>, transform_indices = @transform_6, window_bounds = array<i64: 1, 32>}, {pipeline_mode = #tpu.pipeline_mode<synchronous>, transform_indices = @transform_7, window_bounds = array<i64: 32, 64>}, {pipeline_mode = #tpu.pipeline_mode<synchronous>, transform_indices = @transform_8, window_bounds = array<i64: 1, 64>}, {pipeline_mode = #tpu.pipeline_mode<synchronous>, transform_indices = @transform_9, window_bounds = array<i64: 64, 32>}, {pipeline_mode = #tpu.pipeline_mode<synchronous>, transform_indices = @transform_10, window_bounds = array<i64: 1, 32>}, {pipeline_mode = #tpu.pipeline_mode<synchronous>, transform_indices = @transform_11, window_bounds = array<i64: 1, 32>}, {pipeline_mode = #tpu.pipeline_mode<synchronous>, transform_indices = @transform_12, window_bounds = array<i64: 1, 32>}, {pipeline_mode = #tpu.pipeline_mode<synchronous>, transform_indices = @transform_13, window_bounds = array<i64: 1, 32>}, {pipeline_mode = #tpu.pipeline_mode<synchronous>, transform_indices = @transform_14, window_bounds = array<i64: 1, 32>}, {transform_indices = @transform_15, window_bounds = array<i64: 64, 32>}]} {
    %c0 = arith.constant 0 : index
    %c0_0 = arith.constant 0 : index
    %0 = vector.load %arg1[%c0, %c0_0] : memref<64x64xbf16, #tpu.memory_space<vmem>>, vector<64x64xbf16>
    %c0_1 = arith.constant 0 : index
    %c0_2 = arith.constant 0 : index
    %1 = vector.load %arg4[%c0_1, %c0_2] : memref<64x192xbf16, #tpu.memory_space<vmem>>, vector<64x192xbf16>
    %cst = arith.constant dense<0.000000e+00> : vector<64x192xf32>
    %2 = tpu.matmul %0, %1, %cst {dimension_numbers = #tpu.dot_dimension_numbers<[1], [0], [0], [1], [0, 0, 1, 1], [], []>} : vector<64x64xbf16>, vector<64x192xbf16>, vector<64x192xf32> -> vector<64x192xf32>
    %c0_3 = arith.constant 0 : index
    %c0_4 = arith.constant 0 : index
    %3 = vector.load %arg5[%c0_3, %c0_4] : memref<1x192xf32, #tpu.memory_space<vmem>>, vector<1x192xf32>
    %4 = vector.broadcast %3 : vector<1x192xf32> to vector<64x192xf32>
    %5 = arith.addf %2, %4 : vector<64x192xf32>
    %6 = vector.extract_strided_slice %5 {offsets = [0, 0], sizes = [64, 64], strides = [1, 1]} : vector<64x192xf32> to vector<64x64xf32>
    %7 = arith.truncf %6 : vector<64x64xf32> to vector<64x64xbf16>
    %8 = vector.extract_strided_slice %5 {offsets = [0, 64], sizes = [64, 64], strides = [1, 1]} : vector<64x192xf32> to vector<64x64xf32>
    %9 = arith.truncf %8 : vector<64x64xf32> to vector<64x64xbf16>
    %10 = vector.extract_strided_slice %5 {offsets = [0, 128], sizes = [64, 64], strides = [1, 1]} : vector<64x192xf32> to vector<64x64xf32>
    %11 = arith.truncf %10 : vector<64x64xf32> to vector<64x64xbf16>
    %c0_5 = arith.constant 0 : index
    %c0_6 = arith.constant 0 : index
    %12 = vector.load %arg3[%c0_5, %c0_6] : memref<64x64xf32, #tpu.memory_space<vmem>>, vector<64x64xf32>
    %c0_7 = arith.constant 0 : index
    %c0_8 = arith.constant 0 : index
    %13 = vector.load %arg6[%c0_7, %c0_8] : memref<64x32xbf16, #tpu.memory_space<vmem>>, vector<64x32xbf16>
    %14 = vector.extract_strided_slice %7 {offsets = [0, 0], sizes = [64, 16], strides = [1, 1]} : vector<64x64xbf16> to vector<64x16xbf16>
    %15 = vector.extract_strided_slice %9 {offsets = [0, 0], sizes = [64, 16], strides = [1, 1]} : vector<64x64xbf16> to vector<64x16xbf16>
    %cst_9 = arith.constant dense<0.000000e+00> : vector<64x64xf32>
    %16 = tpu.matmul %14, %15, %cst_9 {dimension_numbers = #tpu.dot_dimension_numbers<[1], [1], [0], [0], [0, 0, 1, 0], [], []>} : vector<64x16xbf16>, vector<64x16xbf16>, vector<64x64xf32> -> vector<64x64xf32>
    %17 = arith.addf %16, %12 : vector<64x64xf32>
    %cst_10 = arith.constant dense<0xFF800000> : vector<64xf32>
    %18 = vector.multi_reduction <maximumf>, %17, %cst_10 [1] : vector<64x64xf32> to vector<64xf32>
    %19 = vector.shape_cast %18 : vector<64xf32> to vector<64x1xf32>
    %20 = vector.broadcast %19 : vector<64x1xf32> to vector<64x64xf32>
    %21 = arith.subf %17, %20 : vector<64x64xf32>
    %22 = math.exp %21 : vector<64x64xf32>
    %cst_11 = arith.constant dense<0.000000e+00> : vector<64xf32>
    %23 = vector.multi_reduction <add>, %22, %cst_11 [1] : vector<64x64xf32> to vector<64xf32>
    %24 = vector.shape_cast %23 : vector<64xf32> to vector<64x1xf32>
    %25 = tpu.reciprocal %24 {approx = true} : vector<64x1xf32> -> vector<64x1xf32>
    %26 = vector.broadcast %25 : vector<64x1xf32> to vector<64x64xf32>
    %27 = arith.mulf %22, %26 : vector<64x64xf32>
    %28 = arith.truncf %27 : vector<64x64xf32> to vector<64x64xbf16>
    %29 = vector.extract_strided_slice %11 {offsets = [0, 0], sizes = [64, 16], strides = [1, 1]} : vector<64x64xbf16> to vector<64x16xbf16>
    %cst_12 = arith.constant dense<0.000000e+00> : vector<64x16xf32>
    %30 = tpu.matmul %28, %29, %cst_12 {dimension_numbers = #tpu.dot_dimension_numbers<[1], [0], [0], [1], [0, 0, 1, 1], [], []>} : vector<64x64xbf16>, vector<64x16xbf16>, vector<64x16xf32> -> vector<64x16xf32>
    %31 = arith.truncf %30 : vector<64x16xf32> to vector<64x16xbf16>
    %32 = vector.extract_strided_slice %13 {offsets = [0, 0], sizes = [16, 32], strides = [1, 1]} : vector<64x32xbf16> to vector<16x32xbf16>
    %cst_13 = arith.constant dense<0.000000e+00> : vector<64x32xf32>
    %33 = tpu.matmul %31, %32, %cst_13 {dimension_numbers = #tpu.dot_dimension_numbers<[1], [0], [0], [1], [0, 0, 1, 1], [], []>} : vector<64x16xbf16>, vector<16x32xbf16>, vector<64x32xf32> -> vector<64x32xf32>
    %34 = vector.extract_strided_slice %7 {offsets = [0, 16], sizes = [64, 16], strides = [1, 1]} : vector<64x64xbf16> to vector<64x16xbf16>
    %35 = vector.extract_strided_slice %9 {offsets = [0, 16], sizes = [64, 16], strides = [1, 1]} : vector<64x64xbf16> to vector<64x16xbf16>
    %cst_14 = arith.constant dense<0.000000e+00> : vector<64x64xf32>
    %36 = tpu.matmul %34, %35, %cst_14 {dimension_numbers = #tpu.dot_dimension_numbers<[1], [1], [0], [0], [0, 0, 1, 0], [], []>} : vector<64x16xbf16>, vector<64x16xbf16>, vector<64x64xf32> -> vector<64x64xf32>
    %37 = arith.addf %36, %12 : vector<64x64xf32>
    %cst_15 = arith.constant dense<0xFF800000> : vector<64xf32>
    %38 = vector.multi_reduction <maximumf>, %37, %cst_15 [1] : vector<64x64xf32> to vector<64xf32>
    %39 = vector.shape_cast %38 : vector<64xf32> to vector<64x1xf32>
    %40 = vector.broadcast %39 : vector<64x1xf32> to vector<64x64xf32>
    %41 = arith.subf %37, %40 : vector<64x64xf32>
    %42 = math.exp %41 : vector<64x64xf32>
    %cst_16 = arith.constant dense<0.000000e+00> : vector<64xf32>
    %43 = vector.multi_reduction <add>, %42, %cst_16 [1] : vector<64x64xf32> to vector<64xf32>
    %44 = vector.shape_cast %43 : vector<64xf32> to vector<64x1xf32>
    %45 = tpu.reciprocal %44 {approx = true} : vector<64x1xf32> -> vector<64x1xf32>
    %46 = vector.broadcast %45 : vector<64x1xf32> to vector<64x64xf32>
    %47 = arith.mulf %42, %46 : vector<64x64xf32>
    %48 = arith.truncf %47 : vector<64x64xf32> to vector<64x64xbf16>
    %49 = vector.extract_strided_slice %11 {offsets = [0, 16], sizes = [64, 16], strides = [1, 1]} : vector<64x64xbf16> to vector<64x16xbf16>
    %cst_17 = arith.constant dense<0.000000e+00> : vector<64x16xf32>
    %50 = tpu.matmul %48, %49, %cst_17 {dimension_numbers = #tpu.dot_dimension_numbers<[1], [0], [0], [1], [0, 0, 1, 1], [], []>} : vector<64x64xbf16>, vector<64x16xbf16>, vector<64x16xf32> -> vector<64x16xf32>
    %51 = arith.truncf %50 : vector<64x16xf32> to vector<64x16xbf16>
    %52 = vector.extract_strided_slice %13 {offsets = [16, 0], sizes = [16, 32], strides = [1, 1]} : vector<64x32xbf16> to vector<16x32xbf16>
    %cst_18 = arith.constant dense<0.000000e+00> : vector<64x32xf32>
    %53 = tpu.matmul %51, %52, %cst_18 {dimension_numbers = #tpu.dot_dimension_numbers<[1], [0], [0], [1], [0, 0, 1, 1], [], []>} : vector<64x16xbf16>, vector<16x32xbf16>, vector<64x32xf32> -> vector<64x32xf32>
    %54 = arith.addf %33, %53 : vector<64x32xf32>
    %55 = vector.extract_strided_slice %7 {offsets = [0, 32], sizes = [64, 16], strides = [1, 1]} : vector<64x64xbf16> to vector<64x16xbf16>
    %56 = vector.extract_strided_slice %9 {offsets = [0, 32], sizes = [64, 16], strides = [1, 1]} : vector<64x64xbf16> to vector<64x16xbf16>
    %cst_19 = arith.constant dense<0.000000e+00> : vector<64x64xf32>
    %57 = tpu.matmul %55, %56, %cst_19 {dimension_numbers = #tpu.dot_dimension_numbers<[1], [1], [0], [0], [0, 0, 1, 0], [], []>} : vector<64x16xbf16>, vector<64x16xbf16>, vector<64x64xf32> -> vector<64x64xf32>
    %58 = arith.addf %57, %12 : vector<64x64xf32>
    %cst_20 = arith.constant dense<0xFF800000> : vector<64xf32>
    %59 = vector.multi_reduction <maximumf>, %58, %cst_20 [1] : vector<64x64xf32> to vector<64xf32>
    %60 = vector.shape_cast %59 : vector<64xf32> to vector<64x1xf32>
    %61 = vector.broadcast %60 : vector<64x1xf32> to vector<64x64xf32>
    %62 = arith.subf %58, %61 : vector<64x64xf32>
    %63 = math.exp %62 : vector<64x64xf32>
    %cst_21 = arith.constant dense<0.000000e+00> : vector<64xf32>
    %64 = vector.multi_reduction <add>, %63, %cst_21 [1] : vector<64x64xf32> to vector<64xf32>
    %65 = vector.shape_cast %64 : vector<64xf32> to vector<64x1xf32>
    %66 = tpu.reciprocal %65 {approx = true} : vector<64x1xf32> -> vector<64x1xf32>
    %67 = vector.broadcast %66 : vector<64x1xf32> to vector<64x64xf32>
    %68 = arith.mulf %63, %67 : vector<64x64xf32>
    %69 = arith.truncf %68 : vector<64x64xf32> to vector<64x64xbf16>
    %70 = vector.extract_strided_slice %11 {offsets = [0, 32], sizes = [64, 16], strides = [1, 1]} : vector<64x64xbf16> to vector<64x16xbf16>
    %cst_22 = arith.constant dense<0.000000e+00> : vector<64x16xf32>
    %71 = tpu.matmul %69, %70, %cst_22 {dimension_numbers = #tpu.dot_dimension_numbers<[1], [0], [0], [1], [0, 0, 1, 1], [], []>} : vector<64x64xbf16>, vector<64x16xbf16>, vector<64x16xf32> -> vector<64x16xf32>
    %72 = arith.truncf %71 : vector<64x16xf32> to vector<64x16xbf16>
    %73 = vector.extract_strided_slice %13 {offsets = [32, 0], sizes = [16, 32], strides = [1, 1]} : vector<64x32xbf16> to vector<16x32xbf16>
    %cst_23 = arith.constant dense<0.000000e+00> : vector<64x32xf32>
    %74 = tpu.matmul %72, %73, %cst_23 {dimension_numbers = #tpu.dot_dimension_numbers<[1], [0], [0], [1], [0, 0, 1, 1], [], []>} : vector<64x16xbf16>, vector<16x32xbf16>, vector<64x32xf32> -> vector<64x32xf32>
    %75 = arith.addf %54, %74 : vector<64x32xf32>
    %76 = vector.extract_strided_slice %7 {offsets = [0, 48], sizes = [64, 16], strides = [1, 1]} : vector<64x64xbf16> to vector<64x16xbf16>
    %77 = vector.extract_strided_slice %9 {offsets = [0, 48], sizes = [64, 16], strides = [1, 1]} : vector<64x64xbf16> to vector<64x16xbf16>
    %cst_24 = arith.constant dense<0.000000e+00> : vector<64x64xf32>
    %78 = tpu.matmul %76, %77, %cst_24 {dimension_numbers = #tpu.dot_dimension_numbers<[1], [1], [0], [0], [0, 0, 1, 0], [], []>} : vector<64x16xbf16>, vector<64x16xbf16>, vector<64x64xf32> -> vector<64x64xf32>
    %79 = arith.addf %78, %12 : vector<64x64xf32>
    %cst_25 = arith.constant dense<0xFF800000> : vector<64xf32>
    %80 = vector.multi_reduction <maximumf>, %79, %cst_25 [1] : vector<64x64xf32> to vector<64xf32>
    %81 = vector.shape_cast %80 : vector<64xf32> to vector<64x1xf32>
    %82 = vector.broadcast %81 : vector<64x1xf32> to vector<64x64xf32>
    %83 = arith.subf %79, %82 : vector<64x64xf32>
    %84 = math.exp %83 : vector<64x64xf32>
    %cst_26 = arith.constant dense<0.000000e+00> : vector<64xf32>
    %85 = vector.multi_reduction <add>, %84, %cst_26 [1] : vector<64x64xf32> to vector<64xf32>
    %86 = vector.shape_cast %85 : vector<64xf32> to vector<64x1xf32>
    %87 = tpu.reciprocal %86 {approx = true} : vector<64x1xf32> -> vector<64x1xf32>
    %88 = vector.broadcast %87 : vector<64x1xf32> to vector<64x64xf32>
    %89 = arith.mulf %84, %88 : vector<64x64xf32>
    %90 = arith.truncf %89 : vector<64x64xf32> to vector<64x64xbf16>
    %91 = vector.extract_strided_slice %11 {offsets = [0, 48], sizes = [64, 16], strides = [1, 1]} : vector<64x64xbf16> to vector<64x16xbf16>
    %cst_27 = arith.constant dense<0.000000e+00> : vector<64x16xf32>
    %92 = tpu.matmul %90, %91, %cst_27 {dimension_numbers = #tpu.dot_dimension_numbers<[1], [0], [0], [1], [0, 0, 1, 1], [], []>} : vector<64x64xbf16>, vector<64x16xbf16>, vector<64x16xf32> -> vector<64x16xf32>
    %93 = arith.truncf %92 : vector<64x16xf32> to vector<64x16xbf16>
    %94 = vector.extract_strided_slice %13 {offsets = [48, 0], sizes = [16, 32], strides = [1, 1]} : vector<64x32xbf16> to vector<16x32xbf16>
    %cst_28 = arith.constant dense<0.000000e+00> : vector<64x32xf32>
    %95 = tpu.matmul %93, %94, %cst_28 {dimension_numbers = #tpu.dot_dimension_numbers<[1], [0], [0], [1], [0, 0, 1, 1], [], []>} : vector<64x16xbf16>, vector<16x32xbf16>, vector<64x32xf32> -> vector<64x32xf32>
    %96 = arith.addf %75, %95 : vector<64x32xf32>
    %c0_29 = arith.constant 0 : index
    %c0_30 = arith.constant 0 : index
    %97 = vector.load %arg7[%c0_29, %c0_30] : memref<1x32xf32, #tpu.memory_space<vmem>>, vector<1x32xf32>
    %98 = vector.broadcast %97 : vector<1x32xf32> to vector<64x32xf32>
    %99 = arith.addf %96, %98 : vector<64x32xf32>
    %c0_31 = arith.constant 0 : index
    %c0_32 = arith.constant 0 : index
    %100 = vector.load %arg2[%c0_31, %c0_32] : memref<64x32xf32, #tpu.memory_space<vmem>>, vector<64x32xf32>
    %101 = arith.addf %100, %99 : vector<64x32xf32>
    %c0_33 = arith.constant 0 : index
    %c0_34 = arith.constant 0 : index
    %102 = vector.load %arg12[%c0_33, %c0_34] : memref<1x32xf32, #tpu.memory_space<vmem>>, vector<1x32xf32>
    %c0_35 = arith.constant 0 : index
    %c0_36 = arith.constant 0 : index
    %103 = vector.load %arg13[%c0_35, %c0_36] : memref<1x32xf32, #tpu.memory_space<vmem>>, vector<1x32xf32>
    %cst_37 = arith.constant dense<0.000000e+00> : vector<64xf32>
    %104 = vector.multi_reduction <add>, %101, %cst_37 [1] : vector<64x32xf32> to vector<64xf32>
    %105 = vector.shape_cast %104 : vector<64xf32> to vector<64x1xf32>
    %cst_38 = arith.constant 3.200000e+01 : f32
    %106 = vector.broadcast %cst_38 : f32 to vector<64x1xf32>
    %107 = arith.divf %105, %106 : vector<64x1xf32>
    %108 = vector.broadcast %107 : vector<64x1xf32> to vector<64x32xf32>
    %109 = arith.subf %101, %108 : vector<64x32xf32>
    %110 = arith.mulf %109, %109 : vector<64x32xf32>
    %cst_39 = arith.constant dense<0.000000e+00> : vector<64xf32>
    %111 = vector.multi_reduction <add>, %110, %cst_39 [1] : vector<64x32xf32> to vector<64xf32>
    %112 = vector.shape_cast %111 : vector<64xf32> to vector<64x1xf32>
    %cst_40 = arith.constant 3.200000e+01 : f32
    %113 = vector.broadcast %cst_40 : f32 to vector<64x1xf32>
    %114 = arith.divf %112, %113 : vector<64x1xf32>
    %115 = vector.broadcast %107 : vector<64x1xf32> to vector<64x32xf32>
    %116 = arith.subf %101, %115 : vector<64x32xf32>
    %cst_41 = arith.constant 9.99999974E-6 : f32
    %117 = vector.broadcast %cst_41 : f32 to vector<64x1xf32>
    %118 = arith.addf %114, %117 : vector<64x1xf32>
    %119 = math.rsqrt %118 : vector<64x1xf32>
    %120 = vector.broadcast %119 : vector<64x1xf32> to vector<64x32xf32>
    %121 = arith.mulf %116, %120 : vector<64x32xf32>
    %122 = vector.broadcast %102 : vector<1x32xf32> to vector<64x32xf32>
    %123 = arith.mulf %121, %122 : vector<64x32xf32>
    %124 = vector.broadcast %103 : vector<1x32xf32> to vector<64x32xf32>
    %125 = arith.addf %123, %124 : vector<64x32xf32>
    %126 = arith.truncf %125 : vector<64x32xf32> to vector<64x32xbf16>
    %c0_42 = arith.constant 0 : index
    %c0_43 = arith.constant 0 : index
    %127 = vector.load %arg8[%c0_42, %c0_43] : memref<32x64xbf16, #tpu.memory_space<vmem>>, vector<32x64xbf16>
    %cst_44 = arith.constant dense<0.000000e+00> : vector<64x64xf32>
    %128 = tpu.matmul %126, %127, %cst_44 {dimension_numbers = #tpu.dot_dimension_numbers<[1], [0], [0], [1], [0, 0, 1, 1], [], []>} : vector<64x32xbf16>, vector<32x64xbf16>, vector<64x64xf32> -> vector<64x64xf32>
    %c0_45 = arith.constant 0 : index
    %c0_46 = arith.constant 0 : index
    %129 = vector.load %arg9[%c0_45, %c0_46] : memref<1x64xf32, #tpu.memory_space<vmem>>, vector<1x64xf32>
    %130 = vector.broadcast %129 : vector<1x64xf32> to vector<64x64xf32>
    %131 = arith.addf %128, %130 : vector<64x64xf32>
    %cst_47 = arith.constant 0.000000e+00 : f32
    %132 = vector.broadcast %cst_47 : f32 to vector<64x64xf32>
    %133 = arith.maximumf %131, %132 : vector<64x64xf32>
    %134 = arith.truncf %133 : vector<64x64xf32> to vector<64x64xbf16>
    %c0_48 = arith.constant 0 : index
    %c0_49 = arith.constant 0 : index
    %135 = vector.load %arg10[%c0_48, %c0_49] : memref<64x32xbf16, #tpu.memory_space<vmem>>, vector<64x32xbf16>
    %cst_50 = arith.constant dense<0.000000e+00> : vector<64x32xf32>
    %136 = tpu.matmul %134, %135, %cst_50 {dimension_numbers = #tpu.dot_dimension_numbers<[1], [0], [0], [1], [0, 0, 1, 1], [], []>} : vector<64x64xbf16>, vector<64x32xbf16>, vector<64x32xf32> -> vector<64x32xf32>
    %c0_51 = arith.constant 0 : index
    %c0_52 = arith.constant 0 : index
    %137 = vector.load %arg11[%c0_51, %c0_52] : memref<1x32xf32, #tpu.memory_space<vmem>>, vector<1x32xf32>
    %138 = vector.broadcast %137 : vector<1x32xf32> to vector<64x32xf32>
    %139 = arith.addf %136, %138 : vector<64x32xf32>
    %140 = arith.addf %125, %139 : vector<64x32xf32>
    %c0_53 = arith.constant 0 : index
    %c0_54 = arith.constant 0 : index
    %141 = vector.load %arg14[%c0_53, %c0_54] : memref<1x32xf32, #tpu.memory_space<vmem>>, vector<1x32xf32>
    %c0_55 = arith.constant 0 : index
    %c0_56 = arith.constant 0 : index
    %142 = vector.load %arg15[%c0_55, %c0_56] : memref<1x32xf32, #tpu.memory_space<vmem>>, vector<1x32xf32>
    %cst_57 = arith.constant dense<0.000000e+00> : vector<64xf32>
    %143 = vector.multi_reduction <add>, %140, %cst_57 [1] : vector<64x32xf32> to vector<64xf32>
    %144 = vector.shape_cast %143 : vector<64xf32> to vector<64x1xf32>
    %cst_58 = arith.constant 3.200000e+01 : f32
    %145 = vector.broadcast %cst_58 : f32 to vector<64x1xf32>
    %146 = arith.divf %144, %145 : vector<64x1xf32>
    %147 = vector.broadcast %146 : vector<64x1xf32> to vector<64x32xf32>
    %148 = arith.subf %140, %147 : vector<64x32xf32>
    %149 = arith.mulf %148, %148 : vector<64x32xf32>
    %cst_59 = arith.constant dense<0.000000e+00> : vector<64xf32>
    %150 = vector.multi_reduction <add>, %149, %cst_59 [1] : vector<64x32xf32> to vector<64xf32>
    %151 = vector.shape_cast %150 : vector<64xf32> to vector<64x1xf32>
    %cst_60 = arith.constant 3.200000e+01 : f32
    %152 = vector.broadcast %cst_60 : f32 to vector<64x1xf32>
    %153 = arith.divf %151, %152 : vector<64x1xf32>
    %154 = vector.broadcast %146 : vector<64x1xf32> to vector<64x32xf32>
    %155 = arith.subf %140, %154 : vector<64x32xf32>
    %cst_61 = arith.constant 9.99999974E-6 : f32
    %156 = vector.broadcast %cst_61 : f32 to vector<64x1xf32>
    %157 = arith.addf %153, %156 : vector<64x1xf32>
    %158 = math.rsqrt %157 : vector<64x1xf32>
    %159 = vector.broadcast %158 : vector<64x1xf32> to vector<64x32xf32>
    %160 = arith.mulf %155, %159 : vector<64x32xf32>
    %161 = vector.broadcast %141 : vector<1x32xf32> to vector<64x32xf32>
    %162 = arith.mulf %160, %161 : vector<64x32xf32>
    %163 = vector.broadcast %142 : vector<1x32xf32> to vector<64x32xf32>
    %164 = arith.addf %162, %163 : vector<64x32xf32>
    %c0_62 = arith.constant 0 : index
    %c0_63 = arith.constant 0 : index
    %165 = vector.load %arg16[%c0_62, %c0_63] : memref<64x32xf32, #tpu.memory_space<vmem>>, vector<64x32xf32>
    tpu.vector_store %arg16[%c0_62, %c0_63], %164 {strides = array<i32>} : memref<64x32xf32, #tpu.memory_space<vmem>>, vector<64x32xf32>,
    return
  }
  func.func @transform_0(%arg0: i32) -> (i32, i32) {
    %c0_i32 = arith.constant 0 : i32
    %c0_i32_0 = arith.constant 0 : i32
    return %arg0, %c0_i32 : i32, i32
  }
  func.func @transform_1(%arg0: i32) -> (i32, i32) {
    %c0_i32 = arith.constant 0 : i32
    %c0_i32_0 = arith.constant 0 : i32
    return %arg0, %c0_i32 : i32, i32
  }
  func.func @transform_2(%arg0: i32) -> (i32, i32) {
    %c0_i32 = arith.constant 0 : i32
    %c0_i32_0 = arith.constant 0 : i32
    %c0_i32_1 = arith.constant 0 : i32
    return %c0_i32, %c0_i32_0 : i32, i32
  }
  func.func @transform_3(%arg0: i32) -> (i32, i32) {
    %c0_i32 = arith.constant 0 : i32
    %c0_i32_0 = arith.constant 0 : i32
    %c0_i32_1 = arith.constant 0 : i32
    return %c0_i32, %c0_i32_0 : i32, i32
  }
  func.func @transform_4(%arg0: i32) -> (i32, i32) {
    %c0_i32 = arith.constant 0 : i32
    %c0_i32_0 = arith.constant 0 : i32
    %c0_i32_1 = arith.constant 0 : i32
    return %c0_i32, %c0_i32_0 : i32, i32
  }
  func.func @transform_5(%arg0: i32) -> (i32, i32) {
    %c0_i32 = arith.constant 0 : i32
    %c0_i32_0 = arith.constant 0 : i32
    %c0_i32_1 = arith.constant 0 : i32
    return %c0_i32, %c0_i32_0 : i32, i32
  }
  func.func @transform_6(%arg0: i32) -> (i32, i32) {
    %c0_i32 = arith.constant 0 : i32
    %c0_i32_0 = arith.constant 0 : i32
    %c0_i32_1 = arith.constant 0 : i32
    return %c0_i32, %c0_i32_0 : i32, i32
  }
  func.func @transform_7(%arg0: i32) -> (i32, i32) {
    %c0_i32 = arith.constant 0 : i32
    %c0_i32_0 = arith.constant 0 : i32
    %c0_i32_1 = arith.constant 0 : i32
    return %c0_i32, %c0_i32_0 : i32, i32
  }
  func.func @transform_8(%arg0: i32) -> (i32, i32) {
    %c0_i32 = arith.constant 0 : i32
    %c0_i32_0 = arith.constant 0 : i32
    %c0_i32_1 = arith.constant 0 : i32
    return %c0_i32, %c0_i32_0 : i32, i32
  }
  func.func @transform_9(%arg0: i32) -> (i32, i32) {
    %c0_i32 = arith.constant 0 : i32
    %c0_i32_0 = arith.constant 0 : i32
    %c0_i32_1 = arith.constant 0 : i32
    return %c0_i32, %c0_i32_0 : i32, i32
  }
  func.func @transform_10(%arg0: i32) -> (i32, i32) {
    %c0_i32 = arith.constant 0 : i32
    %c0_i32_0 = arith.constant 0 : i32
    %c0_i32_1 = arith.constant 0 : i32
    return %c0_i32, %c0_i32_0 : i32, i32
  }
  func.func @transform_11(%arg0: i32) -> (i32, i32) {
    %c0_i32 = arith.constant 0 : i32
    %c0_i32_0 = arith.constant 0 : i32
    %c0_i32_1 = arith.constant 0 : i32
    return %c0_i32, %c0_i32_0 : i32, i32
  }
  func.func @transform_12(%arg0: i32) -> (i32, i32) {
    %c0_i32 = arith.constant 0 : i32
    %c0_i32_0 = arith.constant 0 : i32
    %c0_i32_1 = arith.constant 0 : i32
    return %c0_i32, %c0_i32_0 : i32, i32
  }
  func.func @transform_13(%arg0: i32) -> (i32, i32) {
    %c0_i32 = arith.constant 0 : i32
    %c0_i32_0 = arith.constant 0 : i32
    %c0_i32_1 = arith.constant 0 : i32
    return %c0_i32, %c0_i32_0 : i32, i32
  }
  func.func @transform_14(%arg0: i32) -> (i32, i32) {
    %c0_i32 = arith.constant 0 : i32
    %c0_i32_0 = arith.constant 0 : i32
    %c0_i32_1 = arith.constant 0 : i32
    return %c0_i32, %c0_i32_0 : i32, i32
  }
  func.func @transform_15(%arg0: i32) -> (i32, i32) {
    %c0_i32 = arith.constant 0 : i32
    %c0_i32_0 = arith.constant 0 : i32
    return %arg0, %c0_i32 : i32, i32
  }
}

</mosaic_0001>

<llo_original>
// kernel: tpu_custom_call.1
$region0: #{tpu_custom_call.1}
  #allocation0 [shape = 'u32[]', space=smem, size = 0x4, offset = 0x4, fixed_abs, tag = 'smem constant byte address 0x4 - core index']
  #allocation1 [shape = 'u32[144,128]{1,0:T(1,128)}', space=vmem, size = 0x12000, scoped, tag = 'internal scratch']
  %s0 = inlined_call_operand.hbm [shape: bf16[64,64], index: 0, kind: input, shape index: {}]
  %s1 = inlined_call_operand.vmem [shape: f32[64,32], index: 1, kind: input, shape index: {}]
  %s2 = inlined_call_operand.vmem [shape: f32[64,64], index: 2, kind: input, shape index: {}]
  %s3 = inlined_call_operand.vmem [shape: bf16[64,192], index: 3, kind: input, shape index: {}]
  %s4 = inlined_call_operand.vmem [shape: f32[1,192], index: 4, kind: input, shape index: {}]
  %s5 = inlined_call_operand.vmem [shape: bf16[64,32], index: 5, kind: input, shape index: {}]
  %s6 = inlined_call_operand.vmem [shape: f32[1,32], index: 6, kind: input, shape index: {}]
  %s7 = inlined_call_operand.vmem [shape: bf16[32,64], index: 7, kind: input, shape index: {}]
  %s8 = inlined_call_operand.vmem [shape: f32[1,64], index: 8, kind: input, shape index: {}]
  %s9 = inlined_call_operand.vmem [shape: bf16[64,32], index: 9, kind: input, shape index: {}]
  %s10 = inlined_call_operand.vmem [shape: f32[1,32], index: 10, kind: input, shape index: {}]
  %s11 = inlined_call_operand.vmem [shape: f32[1,32], index: 11, kind: input, shape index: {}]
  %s12 = inlined_call_operand.vmem [shape: f32[1,32], index: 12, kind: input, shape index: {}]
  %s13 = inlined_call_operand.vmem [shape: f32[1,32], index: 13, kind: input, shape index: {}]
  %s14 = inlined_call_operand.vmem [shape: f32[1,32], index: 14, kind: input, shape index: {}]
  %s15 = inlined_call_operand.vmem [shape: f32[64,32], index: 15, kind: output, shape index: {}]
  %s16 = sld [smem:[#allocation0]]
  $region74: #{tpu_custom_call.1} parent=0
    _
  %s18 = ssub.s32 1, %s16
  %s19 = scalar_select 0, %s18, %s16
  $region1: #{tpu_custom_call.1} parent=0
    #allocation2 [shape = 'u8[16384]{0}', space=vmem, size = 0x4000, scoped, tag = 'input window, operand 0, single buffered']
    #allocation3 [shape = 's32[1]{0}', space=sflag, size = 0x4, scoped, tag = 'scoped memory for tpu_custom_call.1']
    %20 = vsyncpa [#allocation3], 0
    // Predicated region
    $region2: #{tpu_custom_call.1} parent=1 // pred_check
      _
    $region3: #{tpu_custom_call.1} parent=1 // pred_check_branch
      %22 = sbr.rel (0) target = $region5
    $region4: #{tpu_custom_call.1} parent=1 // pred_region
      %s24 = ssub.s32 512, 512
      %25 = vsyncadd [#allocation3], %s24
      %s26 = sshll.u32 [#allocation2], 4
      %s27 = int_to_ptr.vmem [resolvable:$true] %s26
      %32 = dma.hbm_to_vmem [thread:$0]  %s0, 512, %s27, [#allocation3], 64, 64, 4
    $region5: #{tpu_custom_call.1} parent=1 // pred_fallthru
      _
    // Predicated region
    $region6: #{tpu_custom_call.1} parent=1 // pred_check
      _
    $region7: #{tpu_custom_call.1} parent=1 // pred_check_branch
      %34 = sbr.rel (0) target = $region9
    $region8: #{tpu_custom_call.1} parent=1 // pred_region
      _
    $region9: #{tpu_custom_call.1} parent=1 // pred_fallthru
      _
    // Predicated region
    $region10: #{tpu_custom_call.1} parent=1 // pred_check
      _
    $region11: #{tpu_custom_call.1} parent=1 // pred_check_branch
      %36 = sbr.rel (0) target = $region13
    $region12: #{tpu_custom_call.1} parent=1 // pred_region
      _
    $region13: #{tpu_custom_call.1} parent=1 // pred_fallthru
      _
    // Predicated region
    $region14: #{tpu_custom_call.1} parent=1 // pred_check
      _
    $region15: #{tpu_custom_call.1} parent=1 // pred_check_branch
      %38 = sbr.rel (0) target = $region17
    $region16: #{tpu_custom_call.1} parent=1 // pred_region
      _
    $region17: #{tpu_custom_call.1} parent=1 // pred_fallthru
      _
    // Predicated region
    $region18: #{tpu_custom_call.1} parent=1 // pred_check
      _
    $region19: #{tpu_custom_call.1} parent=1 // pred_check_branch
      %40 = sbr.rel (0) target = $region21
    $region20: #{tpu_custom_call.1} parent=1 // pred_region
      _
    $region21: #{tpu_custom_call.1} parent=1 // pred_fallthru
      _
    // Predicated region
    $region22: #{tpu_custom_call.1} parent=1 // pred_check
      _
    $region23: #{tpu_custom_call.1} parent=1 // pred_check_branch
      %42 = sbr.rel (0) target = $region25
    $region24: #{tpu_custom_call.1} parent=1 // pred_region
      _
    $region25: #{tpu_custom_call.1} parent=1 // pred_fallthru
      _
    // Predicated region
    $region26: #{tpu_custom_call.1} parent=1 // pred_check
      _
    $region27: #{tpu_custom_call.1} parent=1 // pred_check_branch
      %44 = sbr.rel (0) target = $region29
    $region28: #{tpu_custom_call.1} parent=1 // pred_region
      _
    $region29: #{tpu_custom_call.1} parent=1 // pred_fallthru
      _
    // Predicated region
    $region30: #{tpu_custom_call.1} parent=1 // pred_check
      _
    $region31: #{tpu_custom_call.1} parent=1 // pred_check_branch
      %46 = sbr.rel (0) target = $region33
    $region32: #{tpu_custom_call.1} parent=1 // pred_region
      _
    $region33: #{tpu_custom_call.1} parent=1 // pred_fallthru
      _
    // Predicated region
    $region34: #{tpu_custom_call.1} parent=1 // pred_check
      _
    $region35: #{tpu_custom_call.1} parent=1 // pred_check_branch
      %48 = sbr.rel (0) target = $region37
    $region36: #{tpu_custom_call.1} parent=1 // pred_region
      _
    $region37: #{tpu_custom_call.1} parent=1 // pred_fallthru
      _
    // Predicated region
    $region38: #{tpu_custom_call.1} parent=1 // pred_check
      _
    $region39: #{tpu_custom_call.1} parent=1 // pred_check_branch
      %50 = sbr.rel (0) target = $region41
    $region40: #{tpu_custom_call.1} parent=1 // pred_region
      _
    $region41: #{tpu_custom_call.1} parent=1 // pred_fallthru
      _
    // Predicated region
    $region42: #{tpu_custom_call.1} parent=1 // pred_check
      _
    $region43: #{tpu_custom_call.1} parent=1 // pred_check_branch
      %52 = sbr.rel (0) target = $region45
    $region44: #{tpu_custom_call.1} parent=1 // pred_region
      _
    $region45: #{tpu_custom_call.1} parent=1 // pred_fallthru
      _
    // Predicated region
    $region46: #{tpu_custom_call.1} parent=1 // pred_check
      _
    $region47: #{tpu_custom_call.1} parent=1 // pred_check_branch
      %54 = sbr.rel (0) target = $region49
    $region48: #{tpu_custom_call.1} parent=1 // pred_region
      _
    $region49: #{tpu_custom_call.1} parent=1 // pred_fallthru
      _
    // Predicated region
    $region50: #{tpu_custom_call.1} parent=1 // pred_check
      _
    $region51: #{tpu_custom_call.1} parent=1 // pred_check_branch
      %56 = sbr.rel (0) target = $region53
    $region52: #{tpu_custom_call.1} parent=1 // pred_region
      _
    $region53: #{tpu_custom_call.1} parent=1 // pred_fallthru
      _
    // Predicated region
    $region54: #{tpu_custom_call.1} parent=1 // pred_check
      _
    $region55: #{tpu_custom_call.1} parent=1 // pred_check_branch
      %58 = sbr.rel (0) target = $region57
    $region56: #{tpu_custom_call.1} parent=1 // pred_region
      _
    $region57: #{tpu_custom_call.1} parent=1 // pred_fallthru
      _
    // Predicated region
    $region58: #{tpu_custom_call.1} parent=1 // pred_check
      _
    $region59: #{tpu_custom_call.1} parent=1 // pred_check_branch
      %60 = sbr.rel (0) target = $region61
    $region60: #{tpu_custom_call.1} parent=1 // pred_region
      _
    $region61: #{tpu_custom_call.1} parent=1 // pred_fallthru
      _
    // Predicated region
    $region62: #{tpu_custom_call.1} parent=1 // pred_check
      _
    $region63: #{tpu_custom_call.1} parent=1 // pred_check_branch
      %62 = sbr.rel (0) target = $region65
    $region64: #{tpu_custom_call.1} parent=1 // pred_region
      %63 = dma.done [#allocation3], 512
    $region65: #{tpu_custom_call.1} parent=1 // pred_fallthru
      _
    %v65 = vld [vmem:[#allocation2] sm:$0xf]
    %v66 = vld [vmem:[#allocation2 + $0x4] sm:$0xf]
    %v67 = vld [vmem:[#allocation2 + $0x8] sm:$0xf]
    %v68 = vld [vmem:[#allocation2 + $0xc] sm:$0xf]
    %v69 = vld [vmem:[#allocation2 + $0x10] sm:$0xf]
    %v70 = vld [vmem:[#allocation2 + $0x14] sm:$0xf]
    %v71 = vld [vmem:[#allocation2 + $0x18] sm:$0xf]
    %v72 = vld [vmem:[#allocation2 + $0x1c] sm:$0xf]
    %v73 = vld [vmem:[%s3] sm:$0xff]
    %v74 = vld [vmem:[%s3 + $0x8] sm:$0xff]
    %v75 = vld [vmem:[%s3 + $0x10] sm:$0xff]
    %v76 = vld [vmem:[%s3 + $0x18] sm:$0xff]
    %v77 = vld [vmem:[%s3 + $0x20] sm:$0xff]
    %v78 = vld [vmem:[%s3 + $0x28] sm:$0xff]
    %v79 = vld [vmem:[%s3 + $0x30] sm:$0xff]
    %v80 = vld [vmem:[%s3 + $0x38] sm:$0xff]
    %v81 = vld [vmem:[%s4] sm:$0x3]
    %v83 = vlaneseq
    %v84 = vshrl.u32 %v83, 7
    %v85 = vsub.s32 0, %v84
    %v86 = vrot.slane %v81, %v85
    %v87 = vlaneseq
    %v88 = vshrl.u32 %v87, 7
    %v89 = vsub.s32 1, %v88
    %v90 = vrot.slane %v81, %v89
    %v101 = vunpack.c.l.b16 %v65
    %v102 = vunpack.c.l.b16 %v66
    %v103 = vunpack.c.l.b16 %v67
    %v104 = vunpack.c.l.b16 %v68
    %v105 = vunpack.c.l.b16 %v69
    %v106 = vunpack.c.l.b16 %v70
    %v107 = vunpack.c.l.b16 %v71
    %v108 = vunpack.c.l.b16 %v72
    %v109 = vpack.c.b16 %v102, %v101
    %v110 = vpack.c.b16 %v104, %v103
    %v111 = vpack.c.b16 %v106, %v105
    %v112 = vpack.c.b16 %v108, %v107
    %v121 = vunpack.c.l.b16 %v73
    %v122 = vunpack.c.h.b16 %v73
    %v123 = vunpack.c.l.b16 %v74
    %v124 = vunpack.c.h.b16 %v74
    %v125 = vunpack.c.l.b16 %v75
    %v126 = vunpack.c.h.b16 %v75
    %v127 = vunpack.c.l.b16 %v76
    %v128 = vunpack.c.h.b16 %v76
    %v129 = vunpack.c.l.b16 %v77
    %v130 = vunpack.c.h.b16 %v77
    %v131 = vunpack.c.l.b16 %v78
    %v132 = vunpack.c.h.b16 %v78
    %v133 = vunpack.c.l.b16 %v79
    %v134 = vunpack.c.h.b16 %v79
    %v135 = vunpack.c.l.b16 %v80
    %v136 = vunpack.c.h.b16 %v80
    %v137 = vpack.c.b16 %v123, %v121
    %v138 = vpack.c.b16 %v124, %v122
    %v139 = vpack.c.b16 %v127, %v125
    %v140 = vpack.c.b16 %v128, %v126
    %v141 = vpack.c.b16 %v131, %v129
    %v142 = vpack.c.b16 %v132, %v130
    %v143 = vpack.c.b16 %v135, %v133
    %v144 = vpack.c.b16 %v136, %v134
    %vm153 = vcmask 523264
    %v155 = vsel %vm153, %v109, 0
    %v158 = vsel %vm153, %v110, 0
    %v161 = vsel %vm153, %v111, 0
    %v164 = vsel %vm153, %v112, 0
    %166 = vmatprep.subr.bf16.mxu0 %v138
    %167 = vmatpush1.bf16.msra.mxu0 %v137
    %168 = vmatprep.subr.bf16.mxu0 %v140
    %169 = vmatpush1.bf16.msra.mxu0 %v139
    %170 = vmatprep.subr.bf16.mxu0 %v142
    %171 = vmatpush1.bf16.msra.mxu0 %v141
    %172 = vmatprep.subr.bf16.mxu0 %v144
    %173 = vmatpush1.bf16.msra.mxu0 %v143
    %174 = vmatprep.subr.bf16.mxu0 0
    %175 = vmatpush1.bf16.msra.mxu0 0
    %176 = vmatprep.subr.bf16.mxu0 0
    %177 = vmatpush1.bf16.msra.mxu0 0
    %178 = vmatprep.subr.bf16.mxu0 0
    %179 = vmatpush1.bf16.msra.mxu0 0
    %180 = vmatprep.subr.bf16.mxu0 0
    %181 = vmatpush1.bf16.msra.mxu0 0
    %182 = vmatprep.subr.bf16.mxu0 0
    %183 = vmatpush1.bf16.msra.mxu0 0
    %184 = vmatprep.subr.bf16.mxu0 0
    %185 = vmatpush1.bf16.msra.mxu0 0
    %186 = vmatprep.subr.bf16.mxu0 0
    %187 = vmatpush1.bf16.msra.mxu0 0
    %188 = vmatprep.subr.bf16.mxu0 0
    %189 = vmatpush1.bf16.msra.mxu0 0
    %190 = vmatprep.subr.bf16.mxu0 0
    %191 = vmatpush1.bf16.msra.mxu0 0
    %192 = vmatprep.subr.bf16.mxu0 0
    %193 = vmatpush1.bf16.msra.mxu0 0
    %194 = vmatprep.subr.bf16.mxu0 0
    %195 = vmatpush1.bf16.msra.mxu0 0
    %196 = vmatprep.subr.bf16.mxu0 0
    %197 = vmatpush1.bf16.msra.mxu0 0
    %198 = vmatprep.mubr.bf16.mxu0 0
    %199 = vmatmul.mubr.bf16.gmra.mrb[0].mxu0 %v155
    %v200 = vpop.f32.mrb[0].mxu0
    %v201 = vadd.f32 %v86, %v200
    %v202 = vpop.f32.mrb[0].mxu0
    %v203 = vadd.f32 %v90, %v202
    %v204 = vpop.f32.mrb[0].mxu0
    %v205 = vadd.f32 %v86, %v204
    %v206 = vpop.f32.mrb[0].mxu0
    %v207 = vadd.f32 %v90, %v206
    %208 = vmatprep.mubr.bf16.mxu0 0
    %209 = vmatmul.mubr.bf16.gmra.mrb[0].mxu0 %v158
    %v210 = vpop.f32.mrb[0].mxu0
    %v211 = vadd.f32 %v86, %v210
    %v212 = vpop.f32.mrb[0].mxu0
    %v213 = vadd.f32 %v90, %v212
    %v214 = vpop.f32.mrb[0].mxu0
    %v215 = vadd.f32 %v86, %v214
    %v216 = vpop.f32.mrb[0].mxu0
    %v217 = vadd.f32 %v90, %v216
    %218 = vmatprep.mubr.bf16.mxu0 0
    %219 = vmatmul.mubr.bf16.gmra.mrb[0].mxu0 %v161
    %v220 = vpop.f32.mrb[0].mxu0
    %v221 = vadd.f32 %v86, %v220
    %v222 = vpop.f32.mrb[0].mxu0
    %v223 = vadd.f32 %v90, %v222
    %v224 = vpop.f32.mrb[0].mxu0
    %v225 = vadd.f32 %v86, %v224
    %v226 = vpop.f32.mrb[0].mxu0
    %v227 = vadd.f32 %v90, %v226
    %228 = vmatprep.mubr.bf16.mxu0 0
    %229 = vmatmul.mubr.bf16.gmra.mrb[0].mxu0 %v164
    %v230 = vpop.f32.mrb[0].mxu0
    %v231 = vadd.f32 %v86, %v230
    %v232 = vpop.f32.mrb[0].mxu0
    %v233 = vadd.f32 %v90, %v232
    %v234 = vpop.f32.mrb[0].mxu0
    %v235 = vadd.f32 %v86, %v234
    %v236 = vpop.f32.mrb[0].mxu0
    %v237 = vadd.f32 %v90, %v236
    %238 = vdwg.mxu0
    %v239 = vpack.c.bf16 %v205, %v201
    %v240 = vpack.c.bf16 %v215, %v211
    %v241 = vpack.c.bf16 %v225, %v221
    %v242 = vpack.c.bf16 %v235, %v231
    %v243 = vpack.c.bf16 %v207, %v203
    %v244 = vpack.c.bf16 %v217, %v213
    %v245 = vpack.c.bf16 %v227, %v223
    %v246 = vpack.c.bf16 %v237, %v233
    %v247 = vld [vmem:[%s2] sm:$0xff]
    %v248 = vld [vmem:[%s2 + $0x8] sm:$0xff]
    %v249 = vld [vmem:[%s2 + $0x10] sm:$0xff]
    %v250 = vld [vmem:[%s2 + $0x18] sm:$0xff]
    %v251 = vld [vmem:[%s2 + $0x20] sm:$0xff]
    %v252 = vld [vmem:[%s2 + $0x28] sm:$0xff]
    %v253 = vld [vmem:[%s2 + $0x30] sm:$0xff]
    %v254 = vld [vmem:[%s2 + $0x38] sm:$0xff]
    %v255 = vld [vmem:[%s5] sm:$0xf]
    %v256 = vld [vmem:[%s5 + $0x4] sm:$0xf]
    %v257 = vld [vmem:[%s5 + $0x8] sm:$0xf]
    %v258 = vld [vmem:[%s5 + $0xc] sm:$0xf]
    %v259 = vld [vmem:[%s5 + $0x10] sm:$0xf]
    %v260 = vld [vmem:[%s5 + $0x14] sm:$0xf]
    %v261 = vld [vmem:[%s5 + $0x18] sm:$0xf]
    %v262 = vld [vmem:[%s5 + $0x1c] sm:$0xf]
    %267 = vrot.lane.b32.xlu0 %v239, 64
    %v268 = vpop.permute.xlu0 %267
    %269 = vrot.lane.b32.xlu0 %v240, 64
    %v270 = vpop.permute.xlu0 %269
    %271 = vrot.lane.b32.xlu0 %v241, 64
    %v272 = vpop.permute.xlu0 %271
    %273 = vrot.lane.b32.xlu0 %v242, 64
    %v274 = vpop.permute.xlu0 %273
    %vm275 = vcmask 130048
    %v277 = vsel %vm275, %v239, 0
    %v280 = vsel %vm275, %v240, 0
    %v283 = vsel %vm275, %v241, 0
    %v286 = vsel %vm275, %v242, 0
    %v289 = vsel %vm275, %v268, 0
    %v292 = vsel %vm275, %v270, 0
    %v295 = vsel %vm275, %v272, 0
    %v298 = vsel %vm275, %v274, 0
    %300 = vmatprep.subr.bf16.mxu0 0
    %301 = vmatpush1.bf16.xpose.msra.mxu0 %v289
    %302 = vmatprep.subr.bf16.mxu0 0
    %303 = vmatpush1.bf16.xpose.msra.mxu0 %v292
    %304 = vmatprep.subr.bf16.mxu0 0
    %305 = vmatpush1.bf16.xpose.msra.mxu0 %v295
    %306 = vmatprep.subr.bf16.mxu0 0
    %307 = vmatpush1.bf16.xpose.msra.mxu0 %v298
    %308 = vmatprep.subr.bf16.mxu0 0
    %309 = vmatpush1.bf16.xpose.msra.mxu0 0
    %310 = vmatprep.subr.bf16.mxu0 0
    %311 = vmatpush1.bf16.xpose.msra.mxu0 0
    %312 = vmatprep.subr.bf16.mxu0 0
    %313 = vmatpush1.bf16.xpose.msra.mxu0 0
    %314 = vmatprep.subr.bf16.mxu0 0
    %315 = vmatpush1.bf16.xpose.msra.mxu0 0
    %316 = vmatprep.subr.bf16.mxu0 0
    %317 = vmatpush1.bf16.xpose.msra.mxu0 0
    %318 = vmatprep.subr.bf16.mxu0 0
    %319 = vmatpush1.bf16.xpose.msra.mxu0 0
    %320 = vmatprep.subr.bf16.mxu0 0
    %321 = vmatpush1.bf16.xpose.msra.mxu0 0
    %322 = vmatprep.subr.bf16.mxu0 0
    %323 = vmatpush1.bf16.xpose.msra.mxu0 0
    %324 = vmatprep.subr.bf16.mxu0 0
    %325 = vmatpush1.bf16.xpose.msra.mxu0 0
    %326 = vmatprep.subr.bf16.mxu0 0
    %327 = vmatpush1.bf16.xpose.msra.mxu0 0
    %328 = vmatprep.subr.bf16.mxu0 0
    %329 = vmatpush1.bf16.xpose.msra.mxu0 0
    %330 = vmatprep.subr.bf16.mxu0 0
    %331 = vmatpush1.bf16.xpose.msra.mxu0 0
    %332 = vmatprep.mubr.bf16.mxu0 0
    %333 = vmatmul.mubr.bf16.gmra.mrb[0].mxu0 %v277
    %v334 = vpop.f32.mrb[0].mxu0
    %v335 = vadd.f32 %v247, %v334
    %v336 = vpop.f32.mrb[0].mxu0
    %v337 = vpop.f32.mrb[0].mxu0
    %v338 = vadd.f32 %v248, %v337
    %v339 = vpop.f32.mrb[0].mxu0
    %340 = vmatprep.mubr.bf16.mxu0 0
    %341 = vmatmul.mubr.bf16.gmra.mrb[0].mxu0 %v280
    %v342 = vpop.f32.mrb[0].mxu0
    %v343 = vadd.f32 %v249, %v342
    %v344 = vpop.f32.mrb[0].mxu0
    %v345 = vpop.f32.mrb[0].mxu0
    %v346 = vadd.f32 %v250, %v345
    %v347 = vpop.f32.mrb[0].mxu0
    %348 = vmatprep.mubr.bf16.mxu0 0
    %349 = vmatmul.mubr.bf16.gmra.mrb[0].mxu0 %v283
    %v350 = vpop.f32.mrb[0].mxu0
    %v351 = vadd.f32 %v251, %v350
    %v352 = vpop.f32.mrb[0].mxu0
    %v353 = vpop.f32.mrb[0].mxu0
    %v354 = vadd.f32 %v252, %v353
    %v355 = vpop.f32.mrb[0].mxu0
    %356 = vmatprep.mubr.bf16.mxu0 0
    %357 = vmatmul.mubr.bf16.gmra.mrb[0].mxu0 %v286
    %v358 = vpop.f32.mrb[0].mxu0
    %v359 = vadd.f32 %v253, %v358
    %v360 = vpop.f32.mrb[0].mxu0
    %v361 = vpop.f32.mrb[0].mxu0
    %v362 = vadd.f32 %v254, %v361
    %v363 = vpop.f32.mrb[0].mxu0
    %364 = vdwg.mxu0
    %v365 = vsel %vm153, %v335, -inf
    %366 = vmax.xlane.f32.xlu0 %v365
    %v367 = vpop.xlane.xlu0 %366
    %v368 = vsel %vm153, %v338, -inf
    %369 = vmax.xlane.f32.xlu0 %v368
    %v370 = vpop.xlane.xlu0 %369
    %v371 = vsel %vm153, %v343, -inf
    %372 = vmax.xlane.f32.xlu0 %v371
    %v373 = vpop.xlane.xlu0 %372
    %v374 = vsel %vm153, %v346, -inf
    %375 = vmax.xlane.f32.xlu0 %v374
    %v376 = vpop.xlane.xlu0 %375
    %v377 = vsel %vm153, %v351, -inf
    %378 = vmax.xlane.f32.xlu0 %v377
    %v379 = vpop.xlane.xlu0 %378
    %v380 = vsel %vm153, %v354, -inf
    %381 = vmax.xlane.f32.xlu0 %v380
    %v382 = vpop.xlane.xlu0 %381
    %v383 = vsel %vm153, %v359, -inf
    %384 = vmax.xlane.f32.xlu0 %v383
    %v385 = vpop.xlane.xlu0 %384
    %v386 = vsel %vm153, %v362, -inf
    %387 = vmax.xlane.f32.xlu0 %v386
    %v388 = vpop.xlane.xlu0 %387
    %v389 = vsub.f32 %v335, %v367
    %v390 = vsub.f32 %v338, %v370
    %v391 = vsub.f32 %v343, %v373
    %v392 = vsub.f32 %v346, %v376
    %v393 = vsub.f32 %v351, %v379
    %v394 = vsub.f32 %v354, %v382
    %v395 = vsub.f32 %v359, %v385
    %v396 = vsub.f32 %v362, %v388
    %v397 = vmul.f32 %v389, 1.442695
    %v398 = vpow.pop %v397
    %v399 = vmul.f32 %v390, 1.442695
    %v400 = vpow.pop %v399
    %v401 = vmul.f32 %v391, 1.442695
    %v402 = vpow.pop %v401
    %v403 = vmul.f32 %v392, 1.442695
    %v404 = vpow.pop %v403
    %v405 = vmul.f32 %v393, 1.442695
    %v406 = vpow.pop %v405
    %v407 = vmul.f32 %v394, 1.442695
    %v408 = vpow.pop %v407
    %v409 = vmul.f32 %v395, 1.442695
    %v410 = vpow.pop %v409
    %v411 = vmul.f32 %v396, 1.442695
    %v412 = vpow.pop %v411
    %v413 = vsel %vm153, %v398, 0.0
    %414 = vadd.xlane.f32.xlu0 %v413
    %v415 = vpop.xlane.xlu0 %414
    %v416 = vsel %vm153, %v400, 0.0
    %417 = vadd.xlane.f32.xlu0 %v416
    %v418 = vpop.xlane.xlu0 %417
    %v419 = vsel %vm153, %v402, 0.0
    %420 = vadd.xlane.f32.xlu0 %v419
    %v421 = vpop.xlane.xlu0 %420
    %v422 = vsel %vm153, %v404, 0.0
    %423 = vadd.xlane.f32.xlu0 %v422
    %v424 = vpop.xlane.xlu0 %423
    %v425 = vsel %vm153, %v406, 0.0
    %426 = vadd.xlane.f32.xlu0 %v425
    %v427 = vpop.xlane.xlu0 %426
    %v428 = vsel %vm153, %v408, 0.0
    %429 = vadd.xlane.f32.xlu0 %v428
    %v430 = vpop.xlane.xlu0 %429
    %v431 = vsel %vm153, %v410, 0.0
    %432 = vadd.xlane.f32.xlu0 %v431
    %v433 = vpop.xlane.xlu0 %432
    %v434 = vsel %vm153, %v412, 0.0
    %435 = vadd.xlane.f32.xlu0 %v434
    %v436 = vpop.xlane.xlu0 %435
    %v437 = vrcp.pop %v415
    %v438 = vrcp.pop %v418
    %v439 = vrcp.pop %v421
    %v440 = vrcp.pop %v424
    %v441 = vrcp.pop %v427
    %v442 = vrcp.pop %v430
    %v443 = vrcp.pop %v433
    %v444 = vrcp.pop %v436
    %v445 = vmul.f32 %v398, %v437
    %v446 = vmul.f32 %v400, %v438
    %v447 = vmul.f32 %v402, %v439
    %v448 = vmul.f32 %v404, %v440
    %v449 = vmul.f32 %v406, %v441
    %v450 = vmul.f32 %v408, %v442
    %v451 = vmul.f32 %v410, %v443
    %v452 = vmul.f32 %v412, %v444
    %v453 = vpack.c.bf16 %v446, %v445
    %v454 = vpack.c.bf16 %v448, %v447
    %v455 = vpack.c.bf16 %v450, %v449
    %v456 = vpack.c.bf16 %v452, %v451
    %v458 = vsel %vm153, %v453, 0
    %v461 = vsel %vm153, %v454, 0
    %v464 = vsel %vm153, %v455, 0
    %v467 = vsel %vm153, %v456, 0
    %469 = vmatprep.subr.bf16.mxu0 0
    %470 = vmatpush1.bf16.msra.mxu0 %v243
    %471 = vmatprep.subr.bf16.mxu0 0
    %472 = vmatpush1.bf16.msra.mxu0 %v244
    %473 = vmatprep.subr.bf16.mxu0 0
    %474 = vmatpush1.bf16.msra.mxu0 %v245
    %475 = vmatprep.subr.bf16.mxu0 0
    %476 = vmatpush1.bf16.msra.mxu0 %v246
    %477 = vmatprep.subr.bf16.mxu0 0
    %478 = vmatpush1.bf16.msra.mxu0 0
    %479 = vmatprep.subr.bf16.mxu0 0
    %480 = vmatpush1.bf16.msra.mxu0 0
    %481 = vmatprep.subr.bf16.mxu0 0
    %482 = vmatpush1.bf16.msra.mxu0 0
    %483 = vmatprep.subr.bf16.mxu0 0
    %484 = vmatpush1.bf16.msra.mxu0 0
    %485 = vmatprep.subr.bf16.mxu0 0
    %486 = vmatpush1.bf16.msra.mxu0 0
    %487 = vmatprep.subr.bf16.mxu0 0
    %488 = vmatpush1.bf16.msra.mxu0 0
    %489 = vmatprep.subr.bf16.mxu0 0
    %490 = vmatpush1.bf16.msra.mxu0 0
    %491 = vmatprep.subr.bf16.mxu0 0
    %492 = vmatpush1.bf16.msra.mxu0 0
    %493 = vmatprep.subr.bf16.mxu0 0
    %494 = vmatpush1.bf16.msra.mxu0 0
    %495 = vmatprep.subr.bf16.mxu0 0
    %496 = vmatpush1.bf16.msra.mxu0 0
    %497 = vmatprep.subr.bf16.mxu0 0
    %498 = vmatpush1.bf16.msra.mxu0 0
    %499 = vmatprep.subr.bf16.mxu0 0
    %500 = vmatpush1.bf16.msra.mxu0 0
    %501 = vmatprep.mubr.bf16.mxu0 0
    %502 = vmatmul.mubr.bf16.gmra.mrb[0].mxu0 %v458
    %v503 = vpop.f32.mrb[0].mxu0
    %v504 = vadd.f32 0.0, %v503
    %v505 = vpop.f32.mrb[0].mxu0
    %v506 = vpop.f32.mrb[0].mxu0
    %v507 = vadd.f32 0.0, %v506
    %v508 = vpop.f32.mrb[0].mxu0
    %509 = vmatprep.mubr.bf16.mxu0 0
    %510 = vmatmul.mubr.bf16.gmra.mrb[0].mxu0 %v461
    %v511 = vpop.f32.mrb[0].mxu0
    %v512 = vadd.f32 0.0, %v511
    %v513 = vpop.f32.mrb[0].mxu0
    %v514 = vpop.f32.mrb[0].mxu0
    %v515 = vadd.f32 0.0, %v514
    %v516 = vpop.f32.mrb[0].mxu0
    %517 = vmatprep.mubr.bf16.mxu0 0
    %518 = vmatmul.mubr.bf16.gmra.mrb[0].mxu0 %v464
    %v519 = vpop.f32.mrb[0].mxu0
    %v520 = vadd.f32 0.0, %v519
    %v521 = vpop.f32.mrb[0].mxu0
    %v522 = vpop.f32.mrb[0].mxu0
    %v523 = vadd.f32 0.0, %v522
    %v524 = vpop.f32.mrb[0].mxu0
    %525 = vmatprep.mubr.bf16.mxu0 0
    %526 = vmatmul.mubr.bf16.gmra.mrb[0].mxu0 %v467
    %v527 = vpop.f32.mrb[0].mxu0
    %v528 = vadd.f32 0.0, %v527
    %v529 = vpop.f32.mrb[0].mxu0
    %v530 = vpop.f32.mrb[0].mxu0
    %v531 = vadd.f32 0.0, %v530
    %v532 = vpop.f32.mrb[0].mxu0
    %533 = vdwg.mxu0
    %v534 = vpack.c.bf16 %v507, %v504
    %v535 = vpack.c.bf16 %v515, %v512
    %v536 = vpack.c.bf16 %v523, %v520
    %v537 = vpack.c.bf16 %v531, %v528
    %538 = vrot.lane.b32.xlu0 %v239, 112
    %v539 = vpop.permute.xlu0 %538
    %540 = vrot.lane.b32.xlu0 %v240, 112
    %v541 = vpop.permute.xlu0 %540
    %542 = vrot.lane.b32.xlu0 %v241, 112
    %v543 = vpop.permute.xlu0 %542
    %544 = vrot.lane.b32.xlu0 %v242, 112
    %v545 = vpop.permute.xlu0 %544
    %546 = vrot.lane.b32.xlu0 %v239, 48
    %v547 = vpop.permute.xlu0 %546
    %548 = vrot.lane.b32.xlu0 %v240, 48
    %v549 = vpop.permute.xlu0 %548
    %550 = vrot.lane.b32.xlu0 %v241, 48
    %v551 = vpop.permute.xlu0 %550
    %552 = vrot.lane.b32.xlu0 %v242, 48
    %v553 = vpop.permute.xlu0 %552
    %v555 = vsel %vm275, %v539, 0
    %v558 = vsel %vm275, %v541, 0
    %v561 = vsel %vm275, %v543, 0
    %v564 = vsel %vm275, %v545, 0
    %v567 = vsel %vm275, %v547, 0
    %v570 = vsel %vm275, %v549, 0
    %v573 = vsel %vm275, %v551, 0
    %v576 = vsel %vm275, %v553, 0
    %578 = vmatprep.subr.bf16.mxu0 0
    %579 = vmatpush1.bf16.xpose.msra.mxu0 %v567
    %580 = vmatprep.subr.bf16.mxu0 0
    %581 = vmatpush1.bf16.xpose.msra.mxu0 %v570
    %582 = vmatprep.subr.bf16.mxu0 0
    %583 = vmatpush1.bf16.xpose.msra.mxu0 %v573
    %584 = vmatprep.subr.bf16.mxu0 0
    %585 = vmatpush1.bf16.xpose.msra.mxu0 %v576
    %586 = vmatprep.subr.bf16.mxu0 0
    %587 = vmatpush1.bf16.xpose.msra.mxu0 0
    %588 = vmatprep.subr.bf16.mxu0 0
    %589 = vmatpush1.bf16.xpose.msra.mxu0 0
    %590 = vmatprep.subr.bf16.mxu0 0
    %591 = vmatpush1.bf16.xpose.msra.mxu0 0
    %592 = vmatprep.subr.bf16.mxu0 0
    %593 = vmatpush1.bf16.xpose.msra.mxu0 0
    %594 = vmatprep.subr.bf16.mxu0 0
    %595 = vmatpush1.bf16.xpose.msra.mxu0 0
    %596 = vmatprep.subr.bf16.mxu0 0
    %597 = vmatpush1.bf16.xpose.msra.mxu0 0
    %598 = vmatprep.subr.bf16.mxu0 0
    %599 = vmatpush1.bf16.xpose.msra.mxu0 0
    %600 = vmatprep.subr.bf16.mxu0 0
    %601 = vmatpush1.bf16.xpose.msra.mxu0 0
    %602 = vmatprep.subr.bf16.mxu0 0
    %603 = vmatpush1.bf16.xpose.msra.mxu0 0
    %604 = vmatprep.subr.bf16.mxu0 0
    %605 = vmatpush1.bf16.xpose.msra.mxu0 0
    %606 = vmatprep.subr.bf16.mxu0 0
    %607 = vmatpush1.bf16.xpose.msra.mxu0 0
    %608 = vmatprep.subr.bf16.mxu0 0
    %609 = vmatpush1.bf16.xpose.msra.mxu0 0
    %610 = vmatprep.mubr.bf16.mxu0 0
    %611 = vmatmul.mubr.bf16.gmra.mrb[0].mxu0 %v555
    %v612 = vpop.f32.mrb[0].mxu0
    %v613 = vadd.f32 %v247, %v612
    %v614 = vpop.f32.mrb[0].mxu0
    %v615 = vpop.f32.mrb[0].mxu0
    %v616 = vadd.f32 %v248, %v615
    %v617 = vpop.f32.mrb[0].mxu0
    %618 = vmatprep.mubr.bf16.mxu0 0
    %619 = vmatmul.mubr.bf16.gmra.mrb[0].mxu0 %v558
    %v620 = vpop.f32.mrb[0].mxu0
    %v621 = vadd.f32 %v249, %v620
    %v622 = vpop.f32.mrb[0].mxu0
    %v623 = vpop.f32.mrb[0].mxu0
    %v624 = vadd.f32 %v250, %v623
    %v625 = vpop.f32.mrb[0].mxu0
    %626 = vmatprep.mubr.bf16.mxu0 0
    %627 = vmatmul.mubr.bf16.gmra.mrb[0].mxu0 %v561
    %v628 = vpop.f32.mrb[0].mxu0
    %v629 = vadd.f32 %v251, %v628
    %v630 = vpop.f32.mrb[0].mxu0
    %v631 = vpop.f32.mrb[0].mxu0
    %v632 = vadd.f32 %v252, %v631
    %v633 = vpop.f32.mrb[0].mxu0
    %634 = vmatprep.mubr.bf16.mxu0 0
    %635 = vmatmul.mubr.bf16.gmra.mrb[0].mxu0 %v564
    %v636 = vpop.f32.mrb[0].mxu0
    %v637 = vadd.f32 %v253, %v636
    %v638 = vpop.f32.mrb[0].mxu0
    %v639 = vpop.f32.mrb[0].mxu0
    %v640 = vadd.f32 %v254, %v639
    %v641 = vpop.f32.mrb[0].mxu0
    %642 = vdwg.mxu0
    %v643 = vsel %vm153, %v613, -inf
    %644 = vmax.xlane.f32.xlu0 %v643
    %v645 = vpop.xlane.xlu0 %644
    %v646 = vsel %vm153, %v616, -inf
    %647 = vmax.xlane.f32.xlu0 %v646
    %v648 = vpop.xlane.xlu0 %647
    %v649 = vsel %vm153, %v621, -inf
    %650 = vmax.xlane.f32.xlu0 %v649
    %v651 = vpop.xlane.xlu0 %650
    %v652 = vsel %vm153, %v624, -inf
    %653 = vmax.xlane.f32.xlu0 %v652
    %v654 = vpop.xlane.xlu0 %653
    %v655 = vsel %vm153, %v629, -inf
    %656 = vmax.xlane.f32.xlu0 %v655
    %v657 = vpop.xlane.xlu0 %656
    %v658 = vsel %vm153, %v632, -inf
    %659 = vmax.xlane.f32.xlu0 %v658
    %v660 = vpop.xlane.xlu0 %659
    %v661 = vsel %vm153, %v637, -inf
    %662 = vmax.xlane.f32.xlu0 %v661
    %v663 = vpop.xlane.xlu0 %662
    %v664 = vsel %vm153, %v640, -inf
    %665 = vmax.xlane.f32.xlu0 %v664
    %v666 = vpop.xlane.xlu0 %665
    %v667 = vsub.f32 %v613, %v645
    %v668 = vsub.f32 %v616, %v648
    %v669 = vsub.f32 %v621, %v651
    %v670 = vsub.f32 %v624, %v654
    %v671 = vsub.f32 %v629, %v657
    %v672 = vsub.f32 %v632, %v660
    %v673 = vsub.f32 %v637, %v663
    %v674 = vsub.f32 %v640, %v666
    %v675 = vmul.f32 %v667, 1.442695
    %v676 = vpow.pop %v675
    %v677 = vmul.f32 %v668, 1.442695
    %v678 = vpow.pop %v677
    %v679 = vmul.f32 %v669, 1.442695
    %v680 = vpow.pop %v679
    %v681 = vmul.f32 %v670, 1.442695
    %v682 = vpow.pop %v681
    %v683 = vmul.f32 %v671, 1.442695
    %v684 = vpow.pop %v683
    %v685 = vmul.f32 %v672, 1.442695
    %v686 = vpow.pop %v685
    %v687 = vmul.f32 %v673, 1.442695
    %v688 = vpow.pop %v687
    %v689 = vmul.f32 %v674, 1.442695
    %v690 = vpow.pop %v689
    %v691 = vsel %vm153, %v676, 0.0
    %692 = vadd.xlane.f32.xlu0 %v691
    %v693 = vpop.xlane.xlu0 %692
    %v694 = vsel %vm153, %v678, 0.0
    %695 = vadd.xlane.f32.xlu0 %v694
    %v696 = vpop.xlane.xlu0 %695
    %v697 = vsel %vm153, %v680, 0.0
    %698 = vadd.xlane.f32.xlu0 %v697
    %v699 = vpop.xlane.xlu0 %698
    %v700 = vsel %vm153, %v682, 0.0
    %701 = vadd.xlane.f32.xlu0 %v700
    %v702 = vpop.xlane.xlu0 %701
    %v703 = vsel %vm153, %v684, 0.0
    %704 = vadd.xlane.f32.xlu0 %v703
    %v705 = vpop.xlane.xlu0 %704
    %v706 = vsel %vm153, %v686, 0.0
    %707 = vadd.xlane.f32.xlu0 %v706
    %v708 = vpop.xlane.xlu0 %707
    %v709 = vsel %vm153, %v688, 0.0
    %710 = vadd.xlane.f32.xlu0 %v709
    %v711 = vpop.xlane.xlu0 %710
    %v712 = vsel %vm153, %v690, 0.0
    %713 = vadd.xlane.f32.xlu0 %v712
    %v714 = vpop.xlane.xlu0 %713
    %v715 = vrcp.pop %v693
    %v716 = vrcp.pop %v696
    %v717 = vrcp.pop %v699
    %v718 = vrcp.pop %v702
    %v719 = vrcp.pop %v705
    %v720 = vrcp.pop %v708
    %v721 = vrcp.pop %v711
    %v722 = vrcp.pop %v714
    %v723 = vmul.f32 %v676, %v715
    %v724 = vmul.f32 %v678, %v716
    %v725 = vmul.f32 %v680, %v717
    %v726 = vmul.f32 %v682, %v718
    %v727 = vmul.f32 %v684, %v719
    %v728 = vmul.f32 %v686, %v720
    %v729 = vmul.f32 %v688, %v721
    %v730 = vmul.f32 %v690, %v722
    %v731 = vpack.c.bf16 %v724, %v723
    %v732 = vpack.c.bf16 %v726, %v725
    %v733 = vpack.c.bf16 %v728, %v727
    %v734 = vpack.c.bf16 %v730, %v729
    %739 = vrot.lane.b32.xlu0 %v243, 112
    %v740 = vpop.permute.xlu0 %739
    %741 = vrot.lane.b32.xlu0 %v244, 112
    %v742 = vpop.permute.xlu0 %741
    %743 = vrot.lane.b32.xlu0 %v245, 112
    %v744 = vpop.permute.xlu0 %743
    %745 = vrot.lane.b32.xlu0 %v246, 112
    %v746 = vpop.permute.xlu0 %745
    %v752 = vsel %vm153, %v731, 0
    %v755 = vsel %vm153, %v732, 0
    %v758 = vsel %vm153, %v733, 0
    %v761 = vsel %vm153, %v734, 0
    %763 = vmatprep.subr.bf16.mxu0 0
    %764 = vmatpush1.bf16.msra.mxu0 %v740
    %765 = vmatprep.subr.bf16.mxu0 0
    %766 = vmatpush1.bf16.msra.mxu0 %v742
    %767 = vmatprep.subr.bf16.mxu0 0
    %768 = vmatpush1.bf16.msra.mxu0 %v744
    %769 = vmatprep.subr.bf16.mxu0 0
    %770 = vmatpush1.bf16.msra.mxu0 %v746
    %771 = vmatprep.subr.bf16.mxu0 0
    %772 = vmatpush1.bf16.msra.mxu0 0
    %773 = vmatprep.subr.bf16.mxu0 0
    %774 = vmatpush1.bf16.msra.mxu0 0
    %775 = vmatprep.subr.bf16.mxu0 0
    %776 = vmatpush1.bf16.msra.mxu0 0
    %777 = vmatprep.subr.bf16.mxu0 0
    %778 = vmatpush1.bf16.msra.mxu0 0
    %779 = vmatprep.subr.bf16.mxu0 0
    %780 = vmatpush1.bf16.msra.mxu0 0
    %781 = vmatprep.subr.bf16.mxu0 0
    %782 = vmatpush1.bf16.msra.mxu0 0
    %783 = vmatprep.subr.bf16.mxu0 0
    %784 = vmatpush1.bf16.msra.mxu0 0
    %785 = vmatprep.subr.bf16.mxu0 0
    %786 = vmatpush1.bf16.msra.mxu0 0
    %787 = vmatprep.subr.bf16.mxu0 0
    %788 = vmatpush1.bf16.msra.mxu0 0
    %789 = vmatprep.subr.bf16.mxu0 0
    %790 = vmatpush1.bf16.msra.mxu0 0
    %791 = vmatprep.subr.bf16.mxu0 0
    %792 = vmatpush1.bf16.msra.mxu0 0
    %793 = vmatprep.subr.bf16.mxu0 0
    %794 = vmatpush1.bf16.msra.mxu0 0
    %795 = vmatprep.mubr.bf16.mxu0 0
    %796 = vmatmul.mubr.bf16.gmra.mrb[0].mxu0 %v752
    %v797 = vpop.f32.mrb[0].mxu0
    %v798 = vadd.f32 0.0, %v797
    %v799 = vpop.f32.mrb[0].mxu0
    %v800 = vpop.f32.mrb[0].mxu0
    %v801 = vadd.f32 0.0, %v800
    %v802 = vpop.f32.mrb[0].mxu0
    %803 = vmatprep.mubr.bf16.mxu0 0
    %804 = vmatmul.mubr.bf16.gmra.mrb[0].mxu0 %v755
    %v805 = vpop.f32.mrb[0].mxu0
    %v806 = vadd.f32 0.0, %v805
    %v807 = vpop.f32.mrb[0].mxu0
    %v808 = vpop.f32.mrb[0].mxu0
    %v809 = vadd.f32 0.0, %v808
    %v810 = vpop.f32.mrb[0].mxu0
    %811 = vmatprep.mubr.bf16.mxu0 0
    %812 = vmatmul.mubr.bf16.gmra.mrb[0].mxu0 %v758
    %v813 = vpop.f32.mrb[0].mxu0
    %v814 = vadd.f32 0.0, %v813
    %v815 = vpop.f32.mrb[0].mxu0
    %v816 = vpop.f32.mrb[0].mxu0
    %v817 = vadd.f32 0.0, %v816
    %v818 = vpop.f32.mrb[0].mxu0
    %819 = vmatprep.mubr.bf16.mxu0 0
    %820 = vmatmul.mubr.bf16.gmra.mrb[0].mxu0 %v761
    %v821 = vpop.f32.mrb[0].mxu0
    %v822 = vadd.f32 0.0, %v821
    %v823 = vpop.f32.mrb[0].mxu0
    %v824 = vpop.f32.mrb[0].mxu0
    %v825 = vadd.f32 0.0, %v824
    %v826 = vpop.f32.mrb[0].mxu0
    %827 = vdwg.mxu0
    %v828 = vpack.c.bf16 %v801, %v798
    %v829 = vpack.c.bf16 %v809, %v806
    %v830 = vpack.c.bf16 %v817, %v814
    %v831 = vpack.c.bf16 %v825, %v822
    %v834 = vunpack.c.l.b16 %v257
    %v835 = vunpack.c.l.b16 %v258
    %v836 = vpack.c.b16 %v835, %v834
    %v839 = vsel %vm275, %v828, 0
    %v842 = vsel %vm275, %v829, 0
    %v845 = vsel %vm275, %v830, 0
    %v848 = vsel %vm275, %v831, 0
    %850 = vmatprep.subr.bf16.mxu0 0
    %851 = vmatpush1.bf16.msra.mxu0 %v836
    %852 = vmatprep.subr.bf16.mxu0 0
    %853 = vmatpush1.bf16.msra.mxu0 0
    %854 = vmatprep.subr.bf16.mxu0 0
    %855 = vmatpush1.bf16.msra.mxu0 0
    %856 = vmatprep.subr.bf16.mxu0 0
    %857 = vmatpush1.bf16.msra.mxu0 0
    %858 = vmatprep.subr.bf16.mxu0 0
    %859 = vmatpush1.bf16.msra.mxu0 0
    %860 = vmatprep.subr.bf16.mxu0 0
    %861 = vmatpush1.bf16.msra.mxu0 0
    %862 = vmatprep.subr.bf16.mxu0 0
    %863 = vmatpush1.bf16.msra.mxu0 0
    %864 = vmatprep.subr.bf16.mxu0 0
    %865 = vmatpush1.bf16.msra.mxu0 0
    %866 = vmatprep.subr.bf16.mxu0 0
    %867 = vmatpush1.bf16.msra.mxu0 0
    %868 = vmatprep.subr.bf16.mxu0 0
    %869 = vmatpush1.bf16.msra.mxu0 0
    %870 = vmatprep.subr.bf16.mxu0 0
    %871 = vmatpush1.bf16.msra.mxu0 0
    %872 = vmatprep.subr.bf16.mxu0 0
    %873 = vmatpush1.bf16.msra.mxu0 0
    %874 = vmatprep.subr.bf16.mxu0 0
    %875 = vmatpush1.bf16.msra.mxu0 0
    %876 = vmatprep.subr.bf16.mxu0 0
    %877 = vmatpush1.bf16.msra.mxu0 0
    %878 = vmatprep.subr.bf16.mxu0 0
    %879 = vmatpush1.bf16.msra.mxu0 0
    %880 = vmatprep.subr.bf16.mxu0 0
    %881 = vmatpush1.bf16.msra.mxu0 0
    %882 = vmatprep.mubr.bf16.mxu0 0
    %883 = vmatmul.mubr.bf16.gmra.mrb[0].mxu0 %v839
    %v884 = vpop.f32.mrb[0].mxu0
    %v885 = vadd.f32 0.0, %v884
    %v886 = vpop.f32.mrb[0].mxu0
    %v887 = vpop.f32.mrb[0].mxu0
    %v888 = vadd.f32 0.0, %v887
    %v889 = vpop.f32.mrb[0].mxu0
    %890 = vmatprep.mubr.bf16.mxu0 0
    %891 = vmatmul.mubr.bf16.gmra.mrb[0].mxu0 %v842
    %v892 = vpop.f32.mrb[0].mxu0
    %v893 = vadd.f32 0.0, %v892
    %v894 = vpop.f32.mrb[0].mxu0
    %v895 = vpop.f32.mrb[0].mxu0
    %v896 = vadd.f32 0.0, %v895
    %v897 = vpop.f32.mrb[0].mxu0
    %898 = vmatprep.mubr.bf16.mxu0 0
    %899 = vmatmul.mubr.bf16.gmra.mrb[0].mxu0 %v845
    %v900 = vpop.f32.mrb[0].mxu0
    %v901 = vadd.f32 0.0, %v900
    %v902 = vpop.f32.mrb[0].mxu0
    %v903 = vpop.f32.mrb[0].mxu0
    %v904 = vadd.f32 0.0, %v903
    %v905 = vpop.f32.mrb[0].mxu0
    %906 = vmatprep.mubr.bf16.mxu0 0
    %907 = vmatmul.mubr.bf16.gmra.mrb[0].mxu0 %v848
    %v908 = vpop.f32.mrb[0].mxu0
    %v909 = vadd.f32 0.0, %v908
    %v910 = vpop.f32.mrb[0].mxu0
    %v911 = vpop.f32.mrb[0].mxu0
    %v912 = vadd.f32 0.0, %v911
    %v913 = vpop.f32.mrb[0].mxu0
    %914 = vdwg.mxu0
    %v917 = vunpack.c.l.b16 %v255
    %v918 = vunpack.c.l.b16 %v256
    %v919 = vpack.c.b16 %v918, %v917
    %v922 = vsel %vm275, %v534, 0
    %v925 = vsel %vm275, %v535, 0
    %v928 = vsel %vm275, %v536, 0
    %v931 = vsel %vm275, %v537, 0
    %933 = vmatprep.subr.bf16.mxu0 0
    %934 = vmatpush1.bf16.msra.mxu0 %v919
    %935 = vmatprep.subr.bf16.mxu0 0
    %936 = vmatpush1.bf16.msra.mxu0 0
    %937 = vmatprep.subr.bf16.mxu0 0
    %938 = vmatpush1.bf16.msra.mxu0 0
    %939 = vmatprep.subr.bf16.mxu0 0
    %940 = vmatpush1.bf16.msra.mxu0 0
    %941 = vmatprep.subr.bf16.mxu0 0
    %942 = vmatpush1.bf16.msra.mxu0 0
    %943 = vmatprep.subr.bf16.mxu0 0
    %944 = vmatpush1.bf16.msra.mxu0 0
    %945 = vmatprep.subr.bf16.mxu0 0
    %946 = vmatpush1.bf16.msra.mxu0 0
    %947 = vmatprep.subr.bf16.mxu0 0
    %948 = vmatpush1.bf16.msra.mxu0 0
    %949 = vmatprep.subr.bf16.mxu0 0
    %950 = vmatpush1.bf16.msra.mxu0 0
    %951 = vmatprep.subr.bf16.mxu0 0
    %952 = vmatpush1.bf16.msra.mxu0 0
    %953 = vmatprep.subr.bf16.mxu0 0
    %954 = vmatpush1.bf16.msra.mxu0 0
    %955 = vmatprep.subr.bf16.mxu0 0
    %956 = vmatpush1.bf16.msra.mxu0 0
    %957 = vmatprep.subr.bf16.mxu0 0
    %958 = vmatpush1.bf16.msra.mxu0 0
    %959 = vmatprep.subr.bf16.mxu0 0
    %960 = vmatpush1.bf16.msra.mxu0 0
    %961 = vmatprep.subr.bf16.mxu0 0
    %962 = vmatpush1.bf16.msra.mxu0 0
    %963 = vmatprep.subr.bf16.mxu0 0
    %964 = vmatpush1.bf16.msra.mxu0 0
    %965 = vmatprep.mubr.bf16.mxu0 0
    %966 = vmatmul.mubr.bf16.gmra.mrb[0].mxu0 %v922
    %v967 = vpop.f32.mrb[0].mxu0
    %v968 = vadd.f32 %v885, %v967
    %v969 = vpop.f32.mrb[0].mxu0
    %v970 = vpop.f32.mrb[0].mxu0
    %v971 = vadd.f32 %v888, %v970
    %v972 = vpop.f32.mrb[0].mxu0
    %973 = vmatprep.mubr.bf16.mxu0 0
    %974 = vmatmul.mubr.bf16.gmra.mrb[0].mxu0 %v925
    %v975 = vpop.f32.mrb[0].mxu0
    %v976 = vadd.f32 %v893, %v975
    %v977 = vpop.f32.mrb[0].mxu0
    %v978 = vpop.f32.mrb[0].mxu0
    %v979 = vadd.f32 %v896, %v978
    %v980 = vpop.f32.mrb[0].mxu0
    %981 = vmatprep.mubr.bf16.mxu0 0
    %982 = vmatmul.mubr.bf16.gmra.mrb[0].mxu0 %v928
    %v983 = vpop.f32.mrb[0].mxu0
    %v984 = vadd.f32 %v901, %v983
    %v985 = vpop.f32.mrb[0].mxu0
    %v986 = vpop.f32.mrb[0].mxu0
    %v987 = vadd.f32 %v904, %v986
    %v988 = vpop.f32.mrb[0].mxu0
    %989 = vmatprep.mubr.bf16.mxu0 0
    %990 = vmatmul.mubr.bf16.gmra.mrb[0].mxu0 %v931
    %v991 = vpop.f32.mrb[0].mxu0
    %v992 = vadd.f32 %v909, %v991
    %v993 = vpop.f32.mrb[0].mxu0
    %v994 = vpop.f32.mrb[0].mxu0
    %v995 = vadd.f32 %v912, %v994
    %v996 = vpop.f32.mrb[0].mxu0
    %997 = vdwg.mxu0
    %998 = vrot.lane.b32.xlu0 %v239, 96
    %v999 = vpop.permute.xlu0 %998
    %1000 = vrot.lane.b32.xlu0 %v240, 96
    %v1001 = vpop.permute.xlu0 %1000
    %1002 = vrot.lane.b32.xlu0 %v241, 96
    %v1003 = vpop.permute.xlu0 %1002
    %1004 = vrot.lane.b32.xlu0 %v242, 96
    %v1005 = vpop.permute.xlu0 %1004
    %1006 = vrot.lane.b32.xlu0 %v239, 32
    %v1007 = vpop.permute.xlu0 %1006
    %1008 = vrot.lane.b32.xlu0 %v240, 32
    %v1009 = vpop.permute.xlu0 %1008
    %1010 = vrot.lane.b32.xlu0 %v241, 32
    %v1011 = vpop.permute.xlu0 %1010
    %1012 = vrot.lane.b32.xlu0 %v242, 32
    %v1013 = vpop.permute.xlu0 %1012
    %v1015 = vsel %vm275, %v999, 0
    %v1018 = vsel %vm275, %v1001, 0
    %v1021 = vsel %vm275, %v1003, 0
    %v1024 = vsel %vm275, %v1005, 0
    %v1027 = vsel %vm275, %v1007, 0
    %v1030 = vsel %vm275, %v1009, 0
    %v1033 = vsel %vm275, %v1011, 0
    %v1036 = vsel %vm275, %v1013, 0
    %1038 = vmatprep.subr.bf16.mxu0 0
    %1039 = vmatpush1.bf16.xpose.msra.mxu0 %v1027
    %1040 = vmatprep.subr.bf16.mxu0 0
    %1041 = vmatpush1.bf16.xpose.msra.mxu0 %v1030
    %1042 = vmatprep.subr.bf16.mxu0 0
    %1043 = vmatpush1.bf16.xpose.msra.mxu0 %v1033
    %1044 = vmatprep.subr.bf16.mxu0 0
    %1045 = vmatpush1.bf16.xpose.msra.mxu0 %v1036
    %1046 = vmatprep.subr.bf16.mxu0 0
    %1047 = vmatpush1.bf16.xpose.msra.mxu0 0
    %1048 = vmatprep.subr.bf16.mxu0 0
    %1049 = vmatpush1.bf16.xpose.msra.mxu0 0
    %1050 = vmatprep.subr.bf16.mxu0 0
    %1051 = vmatpush1.bf16.xpose.msra.mxu0 0
    %1052 = vmatprep.subr.bf16.mxu0 0
    %1053 = vmatpush1.bf16.xpose.msra.mxu0 0
    %1054 = vmatprep.subr.bf16.mxu0 0
    %1055 = vmatpush1.bf16.xpose.msra.mxu0 0
    %1056 = vmatprep.subr.bf16.mxu0 0
    %1057 = vmatpush1.bf16.xpose.msra.mxu0 0
    %1058 = vmatprep.subr.bf16.mxu0 0
    %1059 = vmatpush1.bf16.xpose.msra.mxu0 0
    %1060 = vmatprep.subr.bf16.mxu0 0
    %1061 = vmatpush1.bf16.xpose.msra.mxu0 0
    %1062 = vmatprep.subr.bf16.mxu0 0
    %1063 = vmatpush1.bf16.xpose.msra.mxu0 0
    %1064 = vmatprep.subr.bf16.mxu0 0
    %1065 = vmatpush1.bf16.xpose.msra.mxu0 0
    %1066 = vmatprep.subr.bf16.mxu0 0
    %1067 = vmatpush1.bf16.xpose.msra.mxu0 0
    %1068 = vmatprep.subr.bf16.mxu0 0
    %1069 = vmatpush1.bf16.xpose.msra.mxu0 0
    %1070 = vmatprep.mubr.bf16.mxu0 0
    %1071 = vmatmul.mubr.bf16.gmra.mrb[0].mxu0 %v1015
    %v1072 = vpop.f32.mrb[0].mxu0
    %v1073 = vadd.f32 %v247, %v1072
    %v1074 = vpop.f32.mrb[0].mxu0
    %v1075 = vpop.f32.mrb[0].mxu0
    %v1076 = vadd.f32 %v248, %v1075
    %v1077 = vpop.f32.mrb[0].mxu0
    %1078 = vmatprep.mubr.bf16.mxu0 0
    %1079 = vmatmul.mubr.bf16.gmra.mrb[0].mxu0 %v1018
    %v1080 = vpop.f32.mrb[0].mxu0
    %v1081 = vadd.f32 %v249, %v1080
    %v1082 = vpop.f32.mrb[0].mxu0
    %v1083 = vpop.f32.mrb[0].mxu0
    %v1084 = vadd.f32 %v250, %v1083
    %v1085 = vpop.f32.mrb[0].mxu0
    %1086 = vmatprep.mubr.bf16.mxu0 0
    %1087 = vmatmul.mubr.bf16.gmra.mrb[0].mxu0 %v1021
    %v1088 = vpop.f32.mrb[0].mxu0
    %v1089 = vadd.f32 %v251, %v1088
    %v1090 = vpop.f32.mrb[0].mxu0
    %v1091 = vpop.f32.mrb[0].mxu0
    %v1092 = vadd.f32 %v252, %v1091
    %v1093 = vpop.f32.mrb[0].mxu0
    %1094 = vmatprep.mubr.bf16.mxu0 0
    %1095 = vmatmul.mubr.bf16.gmra.mrb[0].mxu0 %v1024
    %v1096 = vpop.f32.mrb[0].mxu0
    %v1097 = vadd.f32 %v253, %v1096
    %v1098 = vpop.f32.mrb[0].mxu0
    %v1099 = vpop.f32.mrb[0].mxu0
    %v1100 = vadd.f32 %v254, %v1099
    %v1101 = vpop.f32.mrb[0].mxu0
    %1102 = vdwg.mxu0
    %v1103 = vsel %vm153, %v1073, -inf
    %1104 = vmax.xlane.f32.xlu0 %v1103
    %v1105 = vpop.xlane.xlu0 %1104
    %v1106 = vsel %vm153, %v1076, -inf
    %1107 = vmax.xlane.f32.xlu0 %v1106
    %v1108 = vpop.xlane.xlu0 %1107
    %v1109 = vsel %vm153, %v1081, -inf
    %1110 = vmax.xlane.f32.xlu0 %v1109
    %v1111 = vpop.xlane.xlu0 %1110
    %v1112 = vsel %vm153, %v1084, -inf
    %1113 = vmax.xlane.f32.xlu0 %v1112
    %v1114 = vpop.xlane.xlu0 %1113
    %v1115 = vsel %vm153, %v1089, -inf
    %1116 = vmax.xlane.f32.xlu0 %v1115
    %v1117 = vpop.xlane.xlu0 %1116
    %v1118 = vsel %vm153, %v1092, -inf
    %1119 = vmax.xlane.f32.xlu0 %v1118
    %v1120 = vpop.xlane.xlu0 %1119
    %v1121 = vsel %vm153, %v1097, -inf
    %1122 = vmax.xlane.f32.xlu0 %v1121
    %v1123 = vpop.xlane.xlu0 %1122
    %v1124 = vsel %vm153, %v1100, -inf
    %1125 = vmax.xlane.f32.xlu0 %v1124
    %v1126 = vpop.xlane.xlu0 %1125
    %v1127 = vsub.f32 %v1073, %v1105
    %v1128 = vsub.f32 %v1076, %v1108
    %v1129 = vsub.f32 %v1081, %v1111
    %v1130 = vsub.f32 %v1084, %v1114
    %v1131 = vsub.f32 %v1089, %v1117
    %v1132 = vsub.f32 %v1092, %v1120
    %v1133 = vsub.f32 %v1097, %v1123
    %v1134 = vsub.f32 %v1100, %v1126
    %v1135 = vmul.f32 %v1127, 1.442695
    %v1136 = vpow.pop %v1135
    %v1137 = vmul.f32 %v1128, 1.442695
    %v1138 = vpow.pop %v1137
    %v1139 = vmul.f32 %v1129, 1.442695
    %v1140 = vpow.pop %v1139
    %v1141 = vmul.f32 %v1130, 1.442695
    %v1142 = vpow.pop %v1141
    %v1143 = vmul.f32 %v1131, 1.442695
    %v1144 = vpow.pop %v1143
    %v1145 = vmul.f32 %v1132, 1.442695
    %v1146 = vpow.pop %v1145
    %v1147 = vmul.f32 %v1133, 1.442695
    %v1148 = vpow.pop %v1147
    %v1149 = vmul.f32 %v1134, 1.442695
    %v1150 = vpow.pop %v1149
    %v1151 = vsel %vm153, %v1136, 0.0
    %1152 = vadd.xlane.f32.xlu0 %v1151
    %v1153 = vpop.xlane.xlu0 %1152
    %v1154 = vsel %vm153, %v1138, 0.0
    %1155 = vadd.xlane.f32.xlu0 %v1154
    %v1156 = vpop.xlane.xlu0 %1155
    %v1157 = vsel %vm153, %v1140, 0.0
    %1158 = vadd.xlane.f32.xlu0 %v1157
    %v1159 = vpop.xlane.xlu0 %1158
    %v1160 = vsel %vm153, %v1142, 0.0
    %1161 = vadd.xlane.f32.xlu0 %v1160
    %v1162 = vpop.xlane.xlu0 %1161
    %v1163 = vsel %vm153, %v1144, 0.0
    %1164 = vadd.xlane.f32.xlu0 %v1163
    %v1165 = vpop.xlane.xlu0 %1164
    %v1166 = vsel %vm153, %v1146, 0.0
    %1167 = vadd.xlane.f32.xlu0 %v1166
    %v1168 = vpop.xlane.xlu0 %1167
    %v1169 = vsel %vm153, %v1148, 0.0
    %1170 = vadd.xlane.f32.xlu0 %v1169
    %v1171 = vpop.xlane.xlu0 %1170
    %v1172 = vsel %vm153, %v1150, 0.0
    %1173 = vadd.xlane.f32.xlu0 %v1172
    %v1174 = vpop.xlane.xlu0 %1173
    %v1175 = vrcp.pop %v1153
    %v1176 = vrcp.pop %v1156
    %v1177 = vrcp.pop %v1159
    %v1178 = vrcp.pop %v1162
    %v1179 = vrcp.pop %v1165
    %v1180 = vrcp.pop %v1168
    %v1181 = vrcp.pop %v1171
    %v1182 = vrcp.pop %v1174
    %v1183 = vmul.f32 %v1136, %v1175
    %v1184 = vmul.f32 %v1138, %v1176
    %v1185 = vmul.f32 %v1140, %v1177
    %v1186 = vmul.f32 %v1142, %v1178
    %v1187 = vmul.f32 %v1144, %v1179
    %v1188 = vmul.f32 %v1146, %v1180
    %v1189 = vmul.f32 %v1148, %v1181
    %v1190 = vmul.f32 %v1150, %v1182
    %v1191 = vpack.c.bf16 %v1184, %v1183
    %v1192 = vpack.c.bf16 %v1186, %v1185
    %v1193 = vpack.c.bf16 %v1188, %v1187
    %v1194 = vpack.c.bf16 %v1190, %v1189
    %1195 = vrot.lane.b32.xlu0 %v243, 96
    %v1196 = vpop.permute.xlu0 %1195
    %1197 = vrot.lane.b32.xlu0 %v244, 96
    %v1198 = vpop.permute.xlu0 %1197
    %1199 = vrot.lane.b32.xlu0 %v245, 96
    %v1200 = vpop.permute.xlu0 %1199
    %1201 = vrot.lane.b32.xlu0 %v246, 96
    %v1202 = vpop.permute.xlu0 %1201
    %v1208 = vsel %vm153, %v1191, 0
    %v1211 = vsel %vm153, %v1192, 0
    %v1214 = vsel %vm153, %v1193, 0
    %v1217 = vsel %vm153, %v1194, 0
    %1219 = vmatprep.subr.bf16.mxu0 0
    %1220 = vmatpush1.bf16.msra.mxu0 %v1196
    %1221 = vmatprep.subr.bf16.mxu0 0
    %1222 = vmatpush1.bf16.msra.mxu0 %v1198
    %1223 = vmatprep.subr.bf16.mxu0 0
    %1224 = vmatpush1.bf16.msra.mxu0 %v1200
    %1225 = vmatprep.subr.bf16.mxu0 0
    %1226 = vmatpush1.bf16.msra.mxu0 %v1202
    %1227 = vmatprep.subr.bf16.mxu0 0
    %1228 = vmatpush1.bf16.msra.mxu0 0
    %1229 = vmatprep.subr.bf16.mxu0 0
    %1230 = vmatpush1.bf16.msra.mxu0 0
    %1231 = vmatprep.subr.bf16.mxu0 0
    %1232 = vmatpush1.bf16.msra.mxu0 0
    %1233 = vmatprep.subr.bf16.mxu0 0
    %1234 = vmatpush1.bf16.msra.mxu0 0
    %1235 = vmatprep.subr.bf16.mxu0 0
    %1236 = vmatpush1.bf16.msra.mxu0 0
    %1237 = vmatprep.subr.bf16.mxu0 0
    %1238 = vmatpush1.bf16.msra.mxu0 0
    %1239 = vmatprep.subr.bf16.mxu0 0
    %1240 = vmatpush1.bf16.msra.mxu0 0
    %1241 = vmatprep.subr.bf16.mxu0 0
    %1242 = vmatpush1.bf16.msra.mxu0 0
    %1243 = vmatprep.subr.bf16.mxu0 0
    %1244 = vmatpush1.bf16.msra.mxu0 0
    %1245 = vmatprep.subr.bf16.mxu0 0
    %1246 = vmatpush1.bf16.msra.mxu0 0
    %1247 = vmatprep.subr.bf16.mxu0 0
    %1248 = vmatpush1.bf16.msra.mxu0 0
    %1249 = vmatprep.subr.bf16.mxu0 0
    %1250 = vmatpush1.bf16.msra.mxu0 0
    %1251 = vmatprep.mubr.bf16.mxu0 0
    %1252 = vmatmul.mubr.bf16.gmra.mrb[0].mxu0 %v1208
    %v1253 = vpop.f32.mrb[0].mxu0
    %v1254 = vadd.f32 0.0, %v1253
    %v1255 = vpop.f32.mrb[0].mxu0
    %v1256 = vpop.f32.mrb[0].mxu0
    %v1257 = vadd.f32 0.0, %v1256
    %v1258 = vpop.f32.mrb[0].mxu0
    %1259 = vmatprep.mubr.bf16.mxu0 0
    %1260 = vmatmul.mubr.bf16.gmra.mrb[0].mxu0 %v1211
    %v1261 = vpop.f32.mrb[0].mxu0
    %v1262 = vadd.f32 0.0, %v1261
    %v1263 = vpop.f32.mrb[0].mxu0
    %v1264 = vpop.f32.mrb[0].mxu0
    %v1265 = vadd.f32 0.0, %v1264
    %v1266 = vpop.f32.mrb[0].mxu0
    %1267 = vmatprep.mubr.bf16.mxu0 0
    %1268 = vmatmul.mubr.bf16.gmra.mrb[0].mxu0 %v1214
    %v1269 = vpop.f32.mrb[0].mxu0
    %v1270 = vadd.f32 0.0, %v1269
    %v1271 = vpop.f32.mrb[0].mxu0
    %v1272 = vpop.f32.mrb[0].mxu0
    %v1273 = vadd.f32 0.0, %v1272
    %v1274 = vpop.f32.mrb[0].mxu0
    %1275 = vmatprep.mubr.bf16.mxu0 0
    %1276 = vmatmul.mubr.bf16.gmra.mrb[0].mxu0 %v1217
    %v1277 = vpop.f32.mrb[0].mxu0
    %v1278 = vadd.f32 0.0, %v1277
    %v1279 = vpop.f32.mrb[0].mxu0
    %v1280 = vpop.f32.mrb[0].mxu0
    %v1281 = vadd.f32 0.0, %v1280
    %v1282 = vpop.f32.mrb[0].mxu0
    %1283 = vdwg.mxu0
    %v1284 = vpack.c.bf16 %v1257, %v1254
    %v1285 = vpack.c.bf16 %v1265, %v1262
    %v1286 = vpack.c.bf16 %v1273, %v1270
    %v1287 = vpack.c.bf16 %v1281, %v1278
    %v1290 = vunpack.c.l.b16 %v259
    %v1291 = vunpack.c.l.b16 %v260
    %v1292 = vpack.c.b16 %v1291, %v1290
    %v1295 = vsel %vm275, %v1284, 0
    %v1298 = vsel %vm275, %v1285, 0
    %v1301 = vsel %vm275, %v1286, 0
    %v1304 = vsel %vm275, %v1287, 0
    %1306 = vmatprep.subr.bf16.mxu0 0
    %1307 = vmatpush1.bf16.msra.mxu0 %v1292
    %1308 = vmatprep.subr.bf16.mxu0 0
    %1309 = vmatpush1.bf16.msra.mxu0 0
    %1310 = vmatprep.subr.bf16.mxu0 0
    %1311 = vmatpush1.bf16.msra.mxu0 0
    %1312 = vmatprep.subr.bf16.mxu0 0
    %1313 = vmatpush1.bf16.msra.mxu0 0
    %1314 = vmatprep.subr.bf16.mxu0 0
    %1315 = vmatpush1.bf16.msra.mxu0 0
    %1316 = vmatprep.subr.bf16.mxu0 0
    %1317 = vmatpush1.bf16.msra.mxu0 0
    %1318 = vmatprep.subr.bf16.mxu0 0
    %1319 = vmatpush1.bf16.msra.mxu0 0
    %1320 = vmatprep.subr.bf16.mxu0 0
    %1321 = vmatpush1.bf16.msra.mxu0 0
    %1322 = vmatprep.subr.bf16.mxu0 0
    %1323 = vmatpush1.bf16.msra.mxu0 0
    %1324 = vmatprep.subr.bf16.mxu0 0
    %1325 = vmatpush1.bf16.msra.mxu0 0
    %1326 = vmatprep.subr.bf16.mxu0 0
    %1327 = vmatpush1.bf16.msra.mxu0 0
    %1328 = vmatprep.subr.bf16.mxu0 0
    %1329 = vmatpush1.bf16.msra.mxu0 0
    %1330 = vmatprep.subr.bf16.mxu0 0
    %1331 = vmatpush1.bf16.msra.mxu0 0
    %1332 = vmatprep.subr.bf16.mxu0 0
    %1333 = vmatpush1.bf16.msra.mxu0 0
    %1334 = vmatprep.subr.bf16.mxu0 0
    %1335 = vmatpush1.bf16.msra.mxu0 0
    %1336 = vmatprep.subr.bf16.mxu0 0
    %1337 = vmatpush1.bf16.msra.mxu0 0
    %1338 = vmatprep.mubr.bf16.mxu0 0
    %1339 = vmatmul.mubr.bf16.gmra.mrb[0].mxu0 %v1295
    %v1340 = vpop.f32.mrb[0].mxu0
    %v1341 = vadd.f32 0.0, %v1340
    %v1342 = vpop.f32.mrb[0].mxu0
    %v1343 = vpop.f32.mrb[0].mxu0
    %v1344 = vadd.f32 0.0, %v1343
    %v1345 = vpop.f32.mrb[0].mxu0
    %1346 = vmatprep.mubr.bf16.mxu0 0
    %1347 = vmatmul.mubr.bf16.gmra.mrb[0].mxu0 %v1298
    %v1348 = vpop.f32.mrb[0].mxu0
    %v1349 = vadd.f32 0.0, %v1348
    %v1350 = vpop.f32.mrb[0].mxu0
    %v1351 = vpop.f32.mrb[0].mxu0
    %v1352 = vadd.f32 0.0, %v1351
    %v1353 = vpop.f32.mrb[0].mxu0
    %1354 = vmatprep.mubr.bf16.mxu0 0
    %1355 = vmatmul.mubr.bf16.gmra.mrb[0].mxu0 %v1301
    %v1356 = vpop.f32.mrb[0].mxu0
    %v1357 = vadd.f32 0.0, %v1356
    %v1358 = vpop.f32.mrb[0].mxu0
    %v1359 = vpop.f32.mrb[0].mxu0
    %v1360 = vadd.f32 0.0, %v1359
    %v1361 = vpop.f32.mrb[0].mxu0
    %1362 = vmatprep.mubr.bf16.mxu0 0
    %1363 = vmatmul.mubr.bf16.gmra.mrb[0].mxu0 %v1304
    %v1364 = vpop.f32.mrb[0].mxu0
    %v1365 = vadd.f32 0.0, %v1364
    %v1366 = vpop.f32.mrb[0].mxu0
    %v1367 = vpop.f32.mrb[0].mxu0
    %v1368 = vadd.f32 0.0, %v1367
    %v1369 = vpop.f32.mrb[0].mxu0
    %1370 = vdwg.mxu0
    %v1371 = vadd.f32 %v968, %v1341
    %v1372 = vadd.f32 %v971, %v1344
    %v1373 = vadd.f32 %v976, %v1349
    %v1374 = vadd.f32 %v979, %v1352
    %v1375 = vadd.f32 %v984, %v1357
    %v1376 = vadd.f32 %v987, %v1360
    %v1377 = vadd.f32 %v992, %v1365
    %v1378 = vadd.f32 %v995, %v1368
    %1379 = vrot.lane.b32.xlu0 %v239, 80
    %v1380 = vpop.permute.xlu0 %1379
    %1381 = vrot.lane.b32.xlu0 %v240, 80
    %v1382 = vpop.permute.xlu0 %1381
    %1383 = vrot.lane.b32.xlu0 %v241, 80
    %v1384 = vpop.permute.xlu0 %1383
    %1385 = vrot.lane.b32.xlu0 %v242, 80
    %v1386 = vpop.permute.xlu0 %1385
    %1387 = vrot.lane.b32.xlu0 %v239, 16
    %v1388 = vpop.permute.xlu0 %1387
    %1389 = vrot.lane.b32.xlu0 %v240, 16
    %v1390 = vpop.permute.xlu0 %1389
    %1391 = vrot.lane.b32.xlu0 %v241, 16
    %v1392 = vpop.permute.xlu0 %1391
    %1393 = vrot.lane.b32.xlu0 %v242, 16
    %v1394 = vpop.permute.xlu0 %1393
    %v1396 = vsel %vm275, %v1380, 0
    %v1399 = vsel %vm275, %v1382, 0
    %v1402 = vsel %vm275, %v1384, 0
    %v1405 = vsel %vm275, %v1386, 0
    %v1408 = vsel %vm275, %v1388, 0
    %v1411 = vsel %vm275, %v1390, 0
    %v1414 = vsel %vm275, %v1392, 0
    %v1417 = vsel %vm275, %v1394, 0
    %1419 = vmatprep.subr.bf16.mxu0 0
    %1420 = vmatpush1.bf16.xpose.msra.mxu0 %v1408
    %1421 = vmatprep.subr.bf16.mxu0 0
    %1422 = vmatpush1.bf16.xpose.msra.mxu0 %v1411
    %1423 = vmatprep.subr.bf16.mxu0 0
    %1424 = vmatpush1.bf16.xpose.msra.mxu0 %v1414
    %1425 = vmatprep.subr.bf16.mxu0 0
    %1426 = vmatpush1.bf16.xpose.msra.mxu0 %v1417
    %1427 = vmatprep.subr.bf16.mxu0 0
    %1428 = vmatpush1.bf16.xpose.msra.mxu0 0
    %1429 = vmatprep.subr.bf16.mxu0 0
    %1430 = vmatpush1.bf16.xpose.msra.mxu0 0
    %1431 = vmatprep.subr.bf16.mxu0 0
    %1432 = vmatpush1.bf16.xpose.msra.mxu0 0
    %1433 = vmatprep.subr.bf16.mxu0 0
    %1434 = vmatpush1.bf16.xpose.msra.mxu0 0
    %1435 = vmatprep.subr.bf16.mxu0 0
    %1436 = vmatpush1.bf16.xpose.msra.mxu0 0
    %1437 = vmatprep.subr.bf16.mxu0 0
    %1438 = vmatpush1.bf16.xpose.msra.mxu0 0
    %1439 = vmatprep.subr.bf16.mxu0 0
    %1440 = vmatpush1.bf16.xpose.msra.mxu0 0
    %1441 = vmatprep.subr.bf16.mxu0 0
    %1442 = vmatpush1.bf16.xpose.msra.mxu0 0
    %1443 = vmatprep.subr.bf16.mxu0 0
    %1444 = vmatpush1.bf16.xpose.msra.mxu0 0
    %1445 = vmatprep.subr.bf16.mxu0 0
    %1446 = vmatpush1.bf16.xpose.msra.mxu0 0
    %1447 = vmatprep.subr.bf16.mxu0 0
    %1448 = vmatpush1.bf16.xpose.msra.mxu0 0
    %1449 = vmatprep.subr.bf16.mxu0 0
    %1450 = vmatpush1.bf16.xpose.msra.mxu0 0
    %1451 = vmatprep.mubr.bf16.mxu0 0
    %1452 = vmatmul.mubr.bf16.gmra.mrb[0].mxu0 %v1396
    %v1453 = vpop.f32.mrb[0].mxu0
    %v1454 = vadd.f32 %v247, %v1453
    %v1455 = vpop.f32.mrb[0].mxu0
    %v1456 = vpop.f32.mrb[0].mxu0
    %v1457 = vadd.f32 %v248, %v1456
    %v1458 = vpop.f32.mrb[0].mxu0
    %1459 = vmatprep.mubr.bf16.mxu0 0
    %1460 = vmatmul.mubr.bf16.gmra.mrb[0].mxu0 %v1399
    %v1461 = vpop.f32.mrb[0].mxu0
    %v1462 = vadd.f32 %v249, %v1461
    %v1463 = vpop.f32.mrb[0].mxu0
    %v1464 = vpop.f32.mrb[0].mxu0
    %v1465 = vadd.f32 %v250, %v1464
    %v1466 = vpop.f32.mrb[0].mxu0
    %1467 = vmatprep.mubr.bf16.mxu0 0
    %1468 = vmatmul.mubr.bf16.gmra.mrb[0].mxu0 %v1402
    %v1469 = vpop.f32.mrb[0].mxu0
    %v1470 = vadd.f32 %v251, %v1469
    %v1471 = vpop.f32.mrb[0].mxu0
    %v1472 = vpop.f32.mrb[0].mxu0
    %v1473 = vadd.f32 %v252, %v1472
    %v1474 = vpop.f32.mrb[0].mxu0
    %1475 = vmatprep.mubr.bf16.mxu0 0
    %1476 = vmatmul.mubr.bf16.gmra.mrb[0].mxu0 %v1405
    %v1477 = vpop.f32.mrb[0].mxu0
    %v1478 = vadd.f32 %v253, %v1477
    %v1479 = vpop.f32.mrb[0].mxu0
    %v1480 = vpop.f32.mrb[0].mxu0
    %v1481 = vadd.f32 %v254, %v1480
    %v1482 = vpop.f32.mrb[0].mxu0
    %1483 = vdwg.mxu0
    %v1484 = vsel %vm153, %v1454, -inf
    %1485 = vmax.xlane.f32.xlu0 %v1484
    %v1486 = vpop.xlane.xlu0 %1485
    %v1487 = vsel %vm153, %v1457, -inf
    %1488 = vmax.xlane.f32.xlu0 %v1487
    %v1489 = vpop.xlane.xlu0 %1488
    %v1490 = vsel %vm153, %v1462, -inf
    %1491 = vmax.xlane.f32.xlu0 %v1490
    %v1492 = vpop.xlane.xlu0 %1491
    %v1493 = vsel %vm153, %v1465, -inf
    %1494 = vmax.xlane.f32.xlu0 %v1493
    %v1495 = vpop.xlane.xlu0 %1494
    %v1496 = vsel %vm153, %v1470, -inf
    %1497 = vmax.xlane.f32.xlu0 %v1496
    %v1498 = vpop.xlane.xlu0 %1497
    %v1499 = vsel %vm153, %v1473, -inf
    %1500 = vmax.xlane.f32.xlu0 %v1499
    %v1501 = vpop.xlane.xlu0 %1500
    %v1502 = vsel %vm153, %v1478, -inf
    %1503 = vmax.xlane.f32.xlu0 %v1502
    %v1504 = vpop.xlane.xlu0 %1503
    %v1505 = vsel %vm153, %v1481, -inf
    %1506 = vmax.xlane.f32.xlu0 %v1505
    %v1507 = vpop.xlane.xlu0 %1506
    %v1508 = vsub.f32 %v1454, %v1486
    %v1509 = vsub.f32 %v1457, %v1489
    %v1510 = vsub.f32 %v1462, %v1492
    %v1511 = vsub.f32 %v1465, %v1495
    %v1512 = vsub.f32 %v1470, %v1498
    %v1513 = vsub.f32 %v1473, %v1501
    %v1514 = vsub.f32 %v1478, %v1504
    %v1515 = vsub.f32 %v1481, %v1507
    %v1516 = vmul.f32 %v1508, 1.442695
    %v1517 = vpow.pop %v1516
    %v1518 = vmul.f32 %v1509, 1.442695
    %v1519 = vpow.pop %v1518
    %v1520 = vmul.f32 %v1510, 1.442695
    %v1521 = vpow.pop %v1520
    %v1522 = vmul.f32 %v1511, 1.442695
    %v1523 = vpow.pop %v1522
    %v1524 = vmul.f32 %v1512, 1.442695
    %v1525 = vpow.pop %v1524
    %v1526 = vmul.f32 %v1513, 1.442695
    %v1527 = vpow.pop %v1526
    %v1528 = vmul.f32 %v1514, 1.442695
    %v1529 = vpow.pop %v1528
    %v1530 = vmul.f32 %v1515, 1.442695
    %v1531 = vpow.pop %v1530
    %v1532 = vsel %vm153, %v1517, 0.0
    %1533 = vadd.xlane.f32.xlu0 %v1532
    %v1534 = vpop.xlane.xlu0 %1533
    %v1535 = vsel %vm153, %v1519, 0.0
    %1536 = vadd.xlane.f32.xlu0 %v1535
    %v1537 = vpop.xlane.xlu0 %1536
    %v1538 = vsel %vm153, %v1521, 0.0
    %1539 = vadd.xlane.f32.xlu0 %v1538
    %v1540 = vpop.xlane.xlu0 %1539
    %v1541 = vsel %vm153, %v1523, 0.0
    %1542 = vadd.xlane.f32.xlu0 %v1541
    %v1543 = vpop.xlane.xlu0 %1542
    %v1544 = vsel %vm153, %v1525, 0.0
    %1545 = vadd.xlane.f32.xlu0 %v1544
    %v1546 = vpop.xlane.xlu0 %1545
    %v1547 = vsel %vm153, %v1527, 0.0
    %1548 = vadd.xlane.f32.xlu0 %v1547
    %v1549 = vpop.xlane.xlu0 %1548
    %v1550 = vsel %vm153, %v1529, 0.0
    %1551 = vadd.xlane.f32.xlu0 %v1550
    %v1552 = vpop.xlane.xlu0 %1551
    %v1553 = vsel %vm153, %v1531, 0.0
    %1554 = vadd.xlane.f32.xlu0 %v1553
    %v1555 = vpop.xlane.xlu0 %1554
    %v1556 = vrcp.pop %v1534
    %v1557 = vrcp.pop %v1537
    %v1558 = vrcp.pop %v1540
    %v1559 = vrcp.pop %v1543
    %v1560 = vrcp.pop %v1546
    %v1561 = vrcp.pop %v1549
    %v1562 = vrcp.pop %v1552
    %v1563 = vrcp.pop %v1555
    %v1564 = vmul.f32 %v1517, %v1556
    %v1565 = vmul.f32 %v1519, %v1557
    %v1566 = vmul.f32 %v1521, %v1558
    %v1567 = vmul.f32 %v1523, %v1559
    %v1568 = vmul.f32 %v1525, %v1560
    %v1569 = vmul.f32 %v1527, %v1561
    %v1570 = vmul.f32 %v1529, %v1562
    %v1571 = vmul.f32 %v1531, %v1563
    %v1572 = vpack.c.bf16 %v1565, %v1564
    %v1573 = vpack.c.bf16 %v1567, %v1566
    %v1574 = vpack.c.bf16 %v1569, %v1568
    %v1575 = vpack.c.bf16 %v1571, %v1570
    %1576 = vrot.lane.b32.xlu0 %v243, 80
    %v1577 = vpop.permute.xlu0 %1576
    %1578 = vrot.lane.b32.xlu0 %v244, 80
    %v1579 = vpop.permute.xlu0 %1578
    %1580 = vrot.lane.b32.xlu0 %v245, 80
    %v1581 = vpop.permute.xlu0 %1580
    %1582 = vrot.lane.b32.xlu0 %v246, 80
    %v1583 = vpop.permute.xlu0 %1582
    %v1589 = vsel %vm153, %v1572, 0
    %v1592 = vsel %vm153, %v1573, 0
    %v1595 = vsel %vm153, %v1574, 0
    %v1598 = vsel %vm153, %v1575, 0
    %1600 = vmatprep.subr.bf16.mxu0 0
    %1601 = vmatpush1.bf16.msra.mxu0 %v1577
    %1602 = vmatprep.subr.bf16.mxu0 0
    %1603 = vmatpush1.bf16.msra.mxu0 %v1579
    %1604 = vmatprep.subr.bf16.mxu0 0
    %1605 = vmatpush1.bf16.msra.mxu0 %v1581
    %1606 = vmatprep.subr.bf16.mxu0 0
    %1607 = vmatpush1.bf16.msra.mxu0 %v1583
    %1608 = vmatprep.subr.bf16.mxu0 0
    %1609 = vmatpush1.bf16.msra.mxu0 0
    %1610 = vmatprep.subr.bf16.mxu0 0
    %1611 = vmatpush1.bf16.msra.mxu0 0
    %1612 = vmatprep.subr.bf16.mxu0 0
    %1613 = vmatpush1.bf16.msra.mxu0 0
    %1614 = vmatprep.subr.bf16.mxu0 0
    %1615 = vmatpush1.bf16.msra.mxu0 0
    %1616 = vmatprep.subr.bf16.mxu0 0
    %1617 = vmatpush1.bf16.msra.mxu0 0
    %1618 = vmatprep.subr.bf16.mxu0 0
    %1619 = vmatpush1.bf16.msra.mxu0 0
    %1620 = vmatprep.subr.bf16.mxu0 0
    %1621 = vmatpush1.bf16.msra.mxu0 0
    %1622 = vmatprep.subr.bf16.mxu0 0
    %1623 = vmatpush1.bf16.msra.mxu0 0
    %1624 = vmatprep.subr.bf16.mxu0 0
    %1625 = vmatpush1.bf16.msra.mxu0 0
    %1626 = vmatprep.subr.bf16.mxu0 0
    %1627 = vmatpush1.bf16.msra.mxu0 0
    %1628 = vmatprep.subr.bf16.mxu0 0
    %1629 = vmatpush1.bf16.msra.mxu0 0
    %1630 = vmatprep.subr.bf16.mxu0 0
    %1631 = vmatpush1.bf16.msra.mxu0 0
    %1632 = vmatprep.mubr.bf16.mxu0 0
    %1633 = vmatmul.mubr.bf16.gmra.mrb[0].mxu0 %v1589
    %v1634 = vpop.f32.mrb[0].mxu0
    %v1635 = vadd.f32 0.0, %v1634
    %v1636 = vpop.f32.mrb[0].mxu0
    %v1637 = vpop.f32.mrb[0].mxu0
    %v1638 = vadd.f32 0.0, %v1637
    %v1639 = vpop.f32.mrb[0].mxu0
    %1640 = vmatprep.mubr.bf16.mxu0 0
    %1641 = vmatmul.mubr.bf16.gmra.mrb[0].mxu0 %v1592
    %v1642 = vpop.f32.mrb[0].mxu0
    %v1643 = vadd.f32 0.0, %v1642
    %v1644 = vpop.f32.mrb[0].mxu0
    %v1645 = vpop.f32.mrb[0].mxu0
    %v1646 = vadd.f32 0.0, %v1645
    %v1647 = vpop.f32.mrb[0].mxu0
    %1648 = vmatprep.mubr.bf16.mxu0 0
    %1649 = vmatmul.mubr.bf16.gmra.mrb[0].mxu0 %v1595
    %v1650 = vpop.f32.mrb[0].mxu0
    %v1651 = vadd.f32 0.0, %v1650
    %v1652 = vpop.f32.mrb[0].mxu0
    %v1653 = vpop.f32.mrb[0].mxu0
    %v1654 = vadd.f32 0.0, %v1653
    %v1655 = vpop.f32.mrb[0].mxu0
    %1656 = vmatprep.mubr.bf16.mxu0 0
    %1657 = vmatmul.mubr.bf16.gmra.mrb[0].mxu0 %v1598
    %v1658 = vpop.f32.mrb[0].mxu0
    %v1659 = vadd.f32 0.0, %v1658
    %v1660 = vpop.f32.mrb[0].mxu0
    %v1661 = vpop.f32.mrb[0].mxu0
    %v1662 = vadd.f32 0.0, %v1661
    %v1663 = vpop.f32.mrb[0].mxu0
    %1664 = vdwg.mxu0
    %v1665 = vpack.c.bf16 %v1638, %v1635
    %v1666 = vpack.c.bf16 %v1646, %v1643
    %v1667 = vpack.c.bf16 %v1654, %v1651
    %v1668 = vpack.c.bf16 %v1662, %v1659
    %v1671 = vunpack.c.l.b16 %v261
    %v1672 = vunpack.c.l.b16 %v262
    %v1673 = vpack.c.b16 %v1672, %v1671
    %v1676 = vsel %vm275, %v1665, 0
    %v1679 = vsel %vm275, %v1666, 0
    %v1682 = vsel %vm275, %v1667, 0
    %v1685 = vsel %vm275, %v1668, 0
    %1687 = vmatprep.subr.bf16.mxu0 0
    %1688 = vmatpush1.bf16.msra.mxu0 %v1673
    %1689 = vmatprep.subr.bf16.mxu0 0
    %1690 = vmatpush1.bf16.msra.mxu0 0
    %1691 = vmatprep.subr.bf16.mxu0 0
    %1692 = vmatpush1.bf16.msra.mxu0 0
    %1693 = vmatprep.subr.bf16.mxu0 0
    %1694 = vmatpush1.bf16.msra.mxu0 0
    %1695 = vmatprep.subr.bf16.mxu0 0
    %1696 = vmatpush1.bf16.msra.mxu0 0
    %1697 = vmatprep.subr.bf16.mxu0 0
    %1698 = vmatpush1.bf16.msra.mxu0 0
    %1699 = vmatprep.subr.bf16.mxu0 0
    %1700 = vmatpush1.bf16.msra.mxu0 0
    %1701 = vmatprep.subr.bf16.mxu0 0
    %1702 = vmatpush1.bf16.msra.mxu0 0
    %1703 = vmatprep.subr.bf16.mxu0 0
    %1704 = vmatpush1.bf16.msra.mxu0 0
    %1705 = vmatprep.subr.bf16.mxu0 0
    %1706 = vmatpush1.bf16.msra.mxu0 0
    %1707 = vmatprep.subr.bf16.mxu0 0
    %1708 = vmatpush1.bf16.msra.mxu0 0
    %1709 = vmatprep.subr.bf16.mxu0 0
    %1710 = vmatpush1.bf16.msra.mxu0 0
    %1711 = vmatprep.subr.bf16.mxu0 0
    %1712 = vmatpush1.bf16.msra.mxu0 0
    %1713 = vmatprep.subr.bf16.mxu0 0
    %1714 = vmatpush1.bf16.msra.mxu0 0
    %1715 = vmatprep.subr.bf16.mxu0 0
    %1716 = vmatpush1.bf16.msra.mxu0 0
    %1717 = vmatprep.subr.bf16.mxu0 0
    %1718 = vmatpush1.bf16.msra.mxu0 0
    %1719 = vmatprep.mubr.bf16.mxu0 0
    %1720 = vmatmul.mubr.bf16.gmra.mrb[0].mxu0 %v1676
    %v1721 = vpop.f32.mrb[0].mxu0
    %v1722 = vadd.f32 0.0, %v1721
    %v1723 = vpop.f32.mrb[0].mxu0
    %v1724 = vpop.f32.mrb[0].mxu0
    %v1725 = vadd.f32 0.0, %v1724
    %v1726 = vpop.f32.mrb[0].mxu0
    %1727 = vmatprep.mubr.bf16.mxu0 0
    %1728 = vmatmul.mubr.bf16.gmra.mrb[0].mxu0 %v1679
    %v1729 = vpop.f32.mrb[0].mxu0
    %v1730 = vadd.f32 0.0, %v1729
    %v1731 = vpop.f32.mrb[0].mxu0
    %v1732 = vpop.f32.mrb[0].mxu0
    %v1733 = vadd.f32 0.0, %v1732
    %v1734 = vpop.f32.mrb[0].mxu0
    %1735 = vmatprep.mubr.bf16.mxu0 0
    %1736 = vmatmul.mubr.bf16.gmra.mrb[0].mxu0 %v1682
    %v1737 = vpop.f32.mrb[0].mxu0
    %v1738 = vadd.f32 0.0, %v1737
    %v1739 = vpop.f32.mrb[0].mxu0
    %v1740 = vpop.f32.mrb[0].mxu0
    %v1741 = vadd.f32 0.0, %v1740
    %v1742 = vpop.f32.mrb[0].mxu0
    %1743 = vmatprep.mubr.bf16.mxu0 0
    %1744 = vmatmul.mubr.bf16.gmra.mrb[0].mxu0 %v1685
    %v1745 = vpop.f32.mrb[0].mxu0
    %v1746 = vadd.f32 0.0, %v1745
    %v1747 = vpop.f32.mrb[0].mxu0
    %v1748 = vpop.f32.mrb[0].mxu0
    %v1749 = vadd.f32 0.0, %v1748
    %v1750 = vpop.f32.mrb[0].mxu0
    %1751 = vdwg.mxu0
    %v1752 = vadd.f32 %v1371, %v1722
    %v1753 = vadd.f32 %v1372, %v1725
    %v1754 = vadd.f32 %v1373, %v1730
    %v1755 = vadd.f32 %v1374, %v1733
    %v1756 = vadd.f32 %v1375, %v1738
    %v1757 = vadd.f32 %v1376, %v1741
    %v1758 = vadd.f32 %v1377, %v1746
    %v1759 = vadd.f32 %v1378, %v1749
    %v1760 = vld [vmem:[%s6] sm:$0x1]
    %v1762 = vlaneseq
    %v1763 = vshrl.u32 %v1762, 7
    %v1764 = vsub.s32 0, %v1763
    %v1765 = vrot.slane %v1760, %v1764
    %v1767 = vadd.f32 %v1752, %v1765
    %v1768 = vadd.f32 %v1753, %v1765
    %v1769 = vadd.f32 %v1754, %v1765
    %v1770 = vadd.f32 %v1755, %v1765
    %v1771 = vadd.f32 %v1756, %v1765
    %v1772 = vadd.f32 %v1757, %v1765
    %v1773 = vadd.f32 %v1758, %v1765
    %v1774 = vadd.f32 %v1759, %v1765
    %v1775 = vld [vmem:[%s1] sm:$0xff]
    %v1776 = vld [vmem:[%s1 + $0x8] sm:$0xff]
    %v1777 = vld [vmem:[%s1 + $0x10] sm:$0xff]
    %v1778 = vld [vmem:[%s1 + $0x18] sm:$0xff]
    %v1779 = vld [vmem:[%s1 + $0x20] sm:$0xff]
    %v1780 = vld [vmem:[%s1 + $0x28] sm:$0xff]
    %v1781 = vld [vmem:[%s1 + $0x30] sm:$0xff]
    %v1782 = vld [vmem:[%s1 + $0x38] sm:$0xff]
    %v1783 = vadd.f32 %v1775, %v1767
    %v1784 = vadd.f32 %v1776, %v1768
    %v1785 = vadd.f32 %v1777, %v1769
    %v1786 = vadd.f32 %v1778, %v1770
    %v1787 = vadd.f32 %v1779, %v1771
    %v1788 = vadd.f32 %v1780, %v1772
    %v1789 = vadd.f32 %v1781, %v1773
    %v1790 = vadd.f32 %v1782, %v1774
    %v1791 = vld [vmem:[%s11] sm:$0x1]
    %v1792 = vld [vmem:[%s12] sm:$0x1]
    %vm1793 = vcmask 261120
    %v1794 = vsel %vm1793, %v1783, 0.0
    %1795 = vadd.xlane.f32.xlu0 %v1794
    %v1796 = vpop.xlane.xlu0 %1795
    %v1797 = vsel %vm1793, %v1784, 0.0
    %1798 = vadd.xlane.f32.xlu0 %v1797
    %v1799 = vpop.xlane.xlu0 %1798
    %v1800 = vsel %vm1793, %v1785, 0.0
    %1801 = vadd.xlane.f32.xlu0 %v1800
    %v1802 = vpop.xlane.xlu0 %1801
    %v1803 = vsel %vm1793, %v1786, 0.0
    %1804 = vadd.xlane.f32.xlu0 %v1803
    %v1805 = vpop.xlane.xlu0 %1804
    %v1806 = vsel %vm1793, %v1787, 0.0
    %1807 = vadd.xlane.f32.xlu0 %v1806
    %v1808 = vpop.xlane.xlu0 %1807
    %v1809 = vsel %vm1793, %v1788, 0.0
    %1810 = vadd.xlane.f32.xlu0 %v1809
    %v1811 = vpop.xlane.xlu0 %1810
    %v1812 = vsel %vm1793, %v1789, 0.0
    %1813 = vadd.xlane.f32.xlu0 %v1812
    %v1814 = vpop.xlane.xlu0 %1813
    %v1815 = vsel %vm1793, %v1790, 0.0
    %1816 = vadd.xlane.f32.xlu0 %v1815
    %v1817 = vpop.xlane.xlu0 %1816
    %v1818 = vrcp.pop 32.0
    %v1819 = vmul.f32 %v1796, %v1818
    %v1820 = vmul.f32 %v1799, %v1818
    %v1821 = vmul.f32 %v1802, %v1818
    %v1822 = vmul.f32 %v1805, %v1818
    %v1823 = vmul.f32 %v1808, %v1818
    %v1824 = vmul.f32 %v1811, %v1818
    %v1825 = vmul.f32 %v1814, %v1818
    %v1826 = vmul.f32 %v1817, %v1818
    %v1827 = vsub.f32 %v1783, %v1819
    %v1828 = vsub.f32 %v1784, %v1820
    %v1829 = vsub.f32 %v1785, %v1821
    %v1830 = vsub.f32 %v1786, %v1822
    %v1831 = vsub.f32 %v1787, %v1823
    %v1832 = vsub.f32 %v1788, %v1824
    %v1833 = vsub.f32 %v1789, %v1825
    %v1834 = vsub.f32 %v1790, %v1826
    %v1835 = vmul.f32 %v1827, %v1827
    %v1836 = vmul.f32 %v1828, %v1828
    %v1837 = vmul.f32 %v1829, %v1829
    %v1838 = vmul.f32 %v1830, %v1830
    %v1839 = vmul.f32 %v1831, %v1831
    %v1840 = vmul.f32 %v1832, %v1832
    %v1841 = vmul.f32 %v1833, %v1833
    %v1842 = vmul.f32 %v1834, %v1834
    %v1843 = vsel %vm1793, %v1835, 0.0
    %1844 = vadd.xlane.f32.xlu0 %v1843
    %v1845 = vpop.xlane.xlu0 %1844
    %v1846 = vsel %vm1793, %v1836, 0.0
    %1847 = vadd.xlane.f32.xlu0 %v1846
    %v1848 = vpop.xlane.xlu0 %1847
    %v1849 = vsel %vm1793, %v1837, 0.0
    %1850 = vadd.xlane.f32.xlu0 %v1849
    %v1851 = vpop.xlane.xlu0 %1850
    %v1852 = vsel %vm1793, %v1838, 0.0
    %1853 = vadd.xlane.f32.xlu0 %v1852
    %v1854 = vpop.xlane.xlu0 %1853
    %v1855 = vsel %vm1793, %v1839, 0.0
    %1856 = vadd.xlane.f32.xlu0 %v1855
    %v1857 = vpop.xlane.xlu0 %1856
    %v1858 = vsel %vm1793, %v1840, 0.0
    %1859 = vadd.xlane.f32.xlu0 %v1858
    %v1860 = vpop.xlane.xlu0 %1859
    %v1861 = vsel %vm1793, %v1841, 0.0
    %1862 = vadd.xlane.f32.xlu0 %v1861
    %v1863 = vpop.xlane.xlu0 %1862
    %v1864 = vsel %vm1793, %v1842, 0.0
    %1865 = vadd.xlane.f32.xlu0 %v1864
    %v1866 = vpop.xlane.xlu0 %1865
    %v1867 = vmul.f32 %v1845, %v1818
    %v1868 = vmul.f32 %v1848, %v1818
    %v1869 = vmul.f32 %v1851, %v1818
    %v1870 = vmul.f32 %v1854, %v1818
    %v1871 = vmul.f32 %v1857, %v1818
    %v1872 = vmul.f32 %v1860, %v1818
    %v1873 = vmul.f32 %v1863, %v1818
    %v1874 = vmul.f32 %v1866, %v1818
    %v1875 = vadd.f32 %v1867, 1e-05
    %v1876 = vadd.f32 %v1868, 1e-05
    %v1877 = vadd.f32 %v1869, 1e-05
    %v1878 = vadd.f32 %v1870, 1e-05
    %v1879 = vadd.f32 %v1871, 1e-05
    %v1880 = vadd.f32 %v1872, 1e-05
    %v1881 = vadd.f32 %v1873, 1e-05
    %v1882 = vadd.f32 %v1874, 1e-05
    %v1883 = vrsqrt.pop %v1875
    %v1884 = vrsqrt.pop %v1876
    %v1885 = vrsqrt.pop %v1877
    %v1886 = vrsqrt.pop %v1878
    %v1887 = vrsqrt.pop %v1879
    %v1888 = vrsqrt.pop %v1880
    %v1889 = vrsqrt.pop %v1881
    %v1890 = vrsqrt.pop %v1882
    %v1891 = vmul.f32 %v1827, %v1883
    %v1892 = vmul.f32 %v1828, %v1884
    %v1893 = vmul.f32 %v1829, %v1885
    %v1894 = vmul.f32 %v1830, %v1886
    %v1895 = vmul.f32 %v1831, %v1887
    %v1896 = vmul.f32 %v1832, %v1888
    %v1897 = vmul.f32 %v1833, %v1889
    %v1898 = vmul.f32 %v1834, %v1890
    %v1900 = vlaneseq
    %v1901 = vshrl.u32 %v1900, 7
    %v1902 = vsub.s32 0, %v1901
    %v1903 = vrot.slane %v1791, %v1902
    %v1905 = vmul.f32 %v1891, %v1903
    %v1906 = vmul.f32 %v1892, %v1903
    %v1907 = vmul.f32 %v1893, %v1903
    %v1908 = vmul.f32 %v1894, %v1903
    %v1909 = vmul.f32 %v1895, %v1903
    %v1910 = vmul.f32 %v1896, %v1903
    %v1911 = vmul.f32 %v1897, %v1903
    %v1912 = vmul.f32 %v1898, %v1903
    %v1914 = vlaneseq
    %v1915 = vshrl.u32 %v1914, 7
    %v1916 = vsub.s32 0, %v1915
    %v1917 = vrot.slane %v1792, %v1916
    %v1919 = vadd.f32 %v1905, %v1917
    %v1920 = vadd.f32 %v1906, %v1917
    %v1921 = vadd.f32 %v1907, %v1917
    %v1922 = vadd.f32 %v1908, %v1917
    %v1923 = vadd.f32 %v1909, %v1917
    %v1924 = vadd.f32 %v1910, %v1917
    %v1925 = vadd.f32 %v1911, %v1917
    %v1926 = vadd.f32 %v1912, %v1917
    %v1927 = vpack.c.bf16 %v1920, %v1919
    %v1928 = vpack.c.bf16 %v1922, %v1921
    %v1929 = vpack.c.bf16 %v1924, %v1923
    %v1930 = vpack.c.bf16 %v1926, %v1925
    %v1931 = vld [vmem:[%s7] sm:$0xf]
    %v1932 = vld [vmem:[%s7 + $0x4] sm:$0xf]
    %v1933 = vld [vmem:[%s7 + $0x8] sm:$0xf]
    %v1934 = vld [vmem:[%s7 + $0xc] sm:$0xf]
    %v1935 = vld [vmem:[%s8] sm:$0x1]
    %v1937 = vlaneseq
    %v1938 = vshrl.u32 %v1937, 7
    %v1939 = vsub.s32 0, %v1938
    %v1940 = vrot.slane %v1935, %v1939
    %v1946 = vunpack.c.l.b16 %v1931
    %v1947 = vunpack.c.l.b16 %v1932
    %v1948 = vunpack.c.l.b16 %v1933
    %v1949 = vunpack.c.l.b16 %v1934
    %v1950 = vpack.c.b16 %v1947, %v1946
    %v1951 = vpack.c.b16 %v1949, %v1948
    %v1955 = vsel %vm1793, %v1927, 0
    %v1958 = vsel %vm1793, %v1928, 0
    %v1961 = vsel %vm1793, %v1929, 0
    %v1964 = vsel %vm1793, %v1930, 0
    %1966 = vmatprep.subr.bf16.mxu0 0
    %1967 = vmatpush1.bf16.msra.mxu0 %v1950
    %1968 = vmatprep.subr.bf16.mxu0 0
    %1969 = vmatpush1.bf16.msra.mxu0 %v1951
    %1970 = vmatprep.subr.bf16.mxu0 0
    %1971 = vmatpush1.bf16.msra.mxu0 0
    %1972 = vmatprep.subr.bf16.mxu0 0
    %1973 = vmatpush1.bf16.msra.mxu0 0
    %1974 = vmatprep.subr.bf16.mxu0 0
    %1975 = vmatpush1.bf16.msra.mxu0 0
    %1976 = vmatprep.subr.bf16.mxu0 0
    %1977 = vmatpush1.bf16.msra.mxu0 0
    %1978 = vmatprep.subr.bf16.mxu0 0
    %1979 = vmatpush1.bf16.msra.mxu0 0
    %1980 = vmatprep.subr.bf16.mxu0 0
    %1981 = vmatpush1.bf16.msra.mxu0 0
    %1982 = vmatprep.subr.bf16.mxu0 0
    %1983 = vmatpush1.bf16.msra.mxu0 0
    %1984 = vmatprep.subr.bf16.mxu0 0
    %1985 = vmatpush1.bf16.msra.mxu0 0
    %1986 = vmatprep.subr.bf16.mxu0 0
    %1987 = vmatpush1.bf16.msra.mxu0 0
    %1988 = vmatprep.subr.bf16.mxu0 0
    %1989 = vmatpush1.bf16.msra.mxu0 0
    %1990 = vmatprep.subr.bf16.mxu0 0
    %1991 = vmatpush1.bf16.msra.mxu0 0
    %1992 = vmatprep.subr.bf16.mxu0 0
    %1993 = vmatpush1.bf16.msra.mxu0 0
    %1994 = vmatprep.subr.bf16.mxu0 0
    %1995 = vmatpush1.bf16.msra.mxu0 0
    %1996 = vmatprep.subr.bf16.mxu0 0
    %1997 = vmatpush1.bf16.msra.mxu0 0
    %1998 = vmatprep.mubr.bf16.mxu0 0
    %1999 = vmatmul.mubr.bf16.gmra.mrb[0].mxu0 %v1955
    %v2000 = vpop.f32.mrb[0].mxu0
    %v2001 = vadd.f32 %v1940, %v2000
    %v2002 = vpop.f32.mrb[0].mxu0
    %v2003 = vpop.f32.mrb[0].mxu0
    %v2004 = vadd.f32 %v1940, %v2003
    %v2005 = vpop.f32.mrb[0].mxu0
    %2006 = vmatprep.mubr.bf16.mxu0 0
    %2007 = vmatmul.mubr.bf16.gmra.mrb[0].mxu0 %v1958
    %v2008 = vpop.f32.mrb[0].mxu0
    %v2009 = vadd.f32 %v1940, %v2008
    %v2010 = vpop.f32.mrb[0].mxu0
    %v2011 = vpop.f32.mrb[0].mxu0
    %v2012 = vadd.f32 %v1940, %v2011
    %v2013 = vpop.f32.mrb[0].mxu0
    %2014 = vmatprep.mubr.bf16.mxu0 0
    %2015 = vmatmul.mubr.bf16.gmra.mrb[0].mxu0 %v1961
    %v2016 = vpop.f32.mrb[0].mxu0
    %v2017 = vadd.f32 %v1940, %v2016
    %v2018 = vpop.f32.mrb[0].mxu0
    %v2019 = vpop.f32.mrb[0].mxu0
    %v2020 = vadd.f32 %v1940, %v2019
    %v2021 = vpop.f32.mrb[0].mxu0
    %2022 = vmatprep.mubr.bf16.mxu0 0
    %2023 = vmatmul.mubr.bf16.gmra.mrb[0].mxu0 %v1964
    %v2024 = vpop.f32.mrb[0].mxu0
    %v2025 = vadd.f32 %v1940, %v2024
    %v2026 = vpop.f32.mrb[0].mxu0
    %v2027 = vpop.f32.mrb[0].mxu0
    %v2028 = vadd.f32 %v1940, %v2027
    %v2029 = vpop.f32.mrb[0].mxu0
    %2030 = vdwg.mxu0
    %v2031 = vmax.f32 %v2001, 0.0
    %v2032 = vmax.f32 %v2004, 0.0
    %v2033 = vmax.f32 %v2009, 0.0
    %v2034 = vmax.f32 %v2012, 0.0
    %v2035 = vmax.f32 %v2017, 0.0
    %v2036 = vmax.f32 %v2020, 0.0
    %v2037 = vmax.f32 %v2025, 0.0
    %v2038 = vmax.f32 %v2028, 0.0
    %v2039 = vpack.c.bf16 %v2032, %v2031
    %v2040 = vpack.c.bf16 %v2034, %v2033
    %v2041 = vpack.c.bf16 %v2036, %v2035
    %v2042 = vpack.c.bf16 %v2038, %v2037
    %v2043 = vld [vmem:[%s9] sm:$0xf]
    %v2044 = vld [vmem:[%s9 + $0x4] sm:$0xf]
    %v2045 = vld [vmem:[%s9 + $0x8] sm:$0xf]
    %v2046 = vld [vmem:[%s9 + $0xc] sm:$0xf]
    %v2047 = vld [vmem:[%s9 + $0x10] sm:$0xf]
    %v2048 = vld [vmem:[%s9 + $0x14] sm:$0xf]
    %v2049 = vld [vmem:[%s9 + $0x18] sm:$0xf]
    %v2050 = vld [vmem:[%s9 + $0x1c] sm:$0xf]
    %v2051 = vld [vmem:[%s10] sm:$0x1]
    %v2053 = vlaneseq
    %v2054 = vshrl.u32 %v2053, 7
    %v2055 = vsub.s32 0, %v2054
    %v2056 = vrot.slane %v2051, %v2055
    %v2066 = vunpack.c.l.b16 %v2043
    %v2067 = vunpack.c.l.b16 %v2044
    %v2068 = vunpack.c.l.b16 %v2045
    %v2069 = vunpack.c.l.b16 %v2046
    %v2070 = vunpack.c.l.b16 %v2047
    %v2071 = vunpack.c.l.b16 %v2048
    %v2072 = vunpack.c.l.b16 %v2049
    %v2073 = vunpack.c.l.b16 %v2050
    %v2074 = vpack.c.b16 %v2067, %v2066
    %v2075 = vpack.c.b16 %v2069, %v2068
    %v2076 = vpack.c.b16 %v2071, %v2070
    %v2077 = vpack.c.b16 %v2073, %v2072
    %v2083 = vsel %vm153, %v2039, 0
    %v2086 = vsel %vm153, %v2040, 0
    %v2089 = vsel %vm153, %v2041, 0
    %v2092 = vsel %vm153, %v2042, 0
    %2094 = vmatprep.subr.bf16.mxu0 0
    %2095 = vmatpush1.bf16.msra.mxu0 %v2074
    %2096 = vmatprep.subr.bf16.mxu0 0
    %2097 = vmatpush1.bf16.msra.mxu0 %v2075
    %2098 = vmatprep.subr.bf16.mxu0 0
    %2099 = vmatpush1.bf16.msra.mxu0 %v2076
    %2100 = vmatprep.subr.bf16.mxu0 0
    %2101 = vmatpush1.bf16.msra.mxu0 %v2077
    %2102 = vmatprep.subr.bf16.mxu0 0
    %2103 = vmatpush1.bf16.msra.mxu0 0
    %2104 = vmatprep.subr.bf16.mxu0 0
    %2105 = vmatpush1.bf16.msra.mxu0 0
    %2106 = vmatprep.subr.bf16.mxu0 0
    %2107 = vmatpush1.bf16.msra.mxu0 0
    %2108 = vmatprep.subr.bf16.mxu0 0
    %2109 = vmatpush1.bf16.msra.mxu0 0
    %2110 = vmatprep.subr.bf16.mxu0 0
    %2111 = vmatpush1.bf16.msra.mxu0 0
    %2112 = vmatprep.subr.bf16.mxu0 0
    %2113 = vmatpush1.bf16.msra.mxu0 0
    %2114 = vmatprep.subr.bf16.mxu0 0
    %2115 = vmatpush1.bf16.msra.mxu0 0
    %2116 = vmatprep.subr.bf16.mxu0 0
    %2117 = vmatpush1.bf16.msra.mxu0 0
    %2118 = vmatprep.subr.bf16.mxu0 0
    %2119 = vmatpush1.bf16.msra.mxu0 0
    %2120 = vmatprep.subr.bf16.mxu0 0
    %2121 = vmatpush1.bf16.msra.mxu0 0
    %2122 = vmatprep.subr.bf16.mxu0 0
    %2123 = vmatpush1.bf16.msra.mxu0 0
    %2124 = vmatprep.subr.bf16.mxu0 0
    %2125 = vmatpush1.bf16.msra.mxu0 0
    %2126 = vmatprep.mubr.bf16.mxu0 0
    %2127 = vmatmul.mubr.bf16.gmra.mrb[0].mxu0 %v2083
    %v2128 = vpop.f32.mrb[0].mxu0
    %v2129 = vadd.f32 %v2056, %v2128
    %v2130 = vpop.f32.mrb[0].mxu0
    %v2131 = vpop.f32.mrb[0].mxu0
    %v2132 = vadd.f32 %v2056, %v2131
    %v2133 = vpop.f32.mrb[0].mxu0
    %2134 = vmatprep.mubr.bf16.mxu0 0
    %2135 = vmatmul.mubr.bf16.gmra.mrb[0].mxu0 %v2086
    %v2136 = vpop.f32.mrb[0].mxu0
    %v2137 = vadd.f32 %v2056, %v2136
    %v2138 = vpop.f32.mrb[0].mxu0
    %v2139 = vpop.f32.mrb[0].mxu0
    %v2140 = vadd.f32 %v2056, %v2139
    %v2141 = vpop.f32.mrb[0].mxu0
    %2142 = vmatprep.mubr.bf16.mxu0 0
    %2143 = vmatmul.mubr.bf16.gmra.mrb[0].mxu0 %v2089
    %v2144 = vpop.f32.mrb[0].mxu0
    %v2145 = vadd.f32 %v2056, %v2144
    %v2146 = vpop.f32.mrb[0].mxu0
    %v2147 = vpop.f32.mrb[0].mxu0
    %v2148 = vadd.f32 %v2056, %v2147
    %v2149 = vpop.f32.mrb[0].mxu0
    %2150 = vmatprep.mubr.bf16.mxu0 0
    %2151 = vmatmul.mubr.bf16.gmra.mrb[0].mxu0 %v2092
    %v2152 = vpop.f32.mrb[0].mxu0
    %v2153 = vadd.f32 %v2056, %v2152
    %v2154 = vpop.f32.mrb[0].mxu0
    %v2155 = vpop.f32.mrb[0].mxu0
    %v2156 = vadd.f32 %v2056, %v2155
    %v2157 = vpop.f32.mrb[0].mxu0
    %2158 = vdwg.mxu0
    %v2159 = vadd.f32 %v1919, %v2129
    %v2160 = vadd.f32 %v1920, %v2132
    %v2161 = vadd.f32 %v1921, %v2137
    %v2162 = vadd.f32 %v1922, %v2140
    %v2163 = vadd.f32 %v1923, %v2145
    %v2164 = vadd.f32 %v1924, %v2148
    %v2165 = vadd.f32 %v1925, %v2153
    %v2166 = vadd.f32 %v1926, %v2156
    %v2167 = vld [vmem:[%s13] sm:$0x1]
    %v2168 = vld [vmem:[%s14] sm:$0x1]
    %v2169 = vsel %vm1793, %v2159, 0.0
    %2170 = vadd.xlane.f32.xlu0 %v2169
    %v2171 = vpop.xlane.xlu0 %2170
    %v2172 = vsel %vm1793, %v2160, 0.0
    %2173 = vadd.xlane.f32.xlu0 %v2172
    %v2174 = vpop.xlane.xlu0 %2173
    %v2175 = vsel %vm1793, %v2161, 0.0
    %2176 = vadd.xlane.f32.xlu0 %v2175
    %v2177 = vpop.xlane.xlu0 %2176
    %v2178 = vsel %vm1793, %v2162, 0.0
    %2179 = vadd.xlane.f32.xlu0 %v2178
    %v2180 = vpop.xlane.xlu0 %2179
    %v2181 = vsel %vm1793, %v2163, 0.0
    %2182 = vadd.xlane.f32.xlu0 %v2181
    %v2183 = vpop.xlane.xlu0 %2182
    %v2184 = vsel %vm1793, %v2164, 0.0
    %2185 = vadd.xlane.f32.xlu0 %v2184
    %v2186 = vpop.xlane.xlu0 %2185
    %v2187 = vsel %vm1793, %v2165, 0.0
    %2188 = vadd.xlane.f32.xlu0 %v2187
    %v2189 = vpop.xlane.xlu0 %2188
    %v2190 = vsel %vm1793, %v2166, 0.0
    %2191 = vadd.xlane.f32.xlu0 %v2190
    %v2192 = vpop.xlane.xlu0 %2191
    %v2193 = vmul.f32 %v2171, %v1818
    %v2194 = vmul.f32 %v2174, %v1818
    %v2195 = vmul.f32 %v2177, %v1818
    %v2196 = vmul.f32 %v2180, %v1818
    %v2197 = vmul.f32 %v2183, %v1818
    %v2198 = vmul.f32 %v2186, %v1818
    %v2199 = vmul.f32 %v2189, %v1818
    %v2200 = vmul.f32 %v2192, %v1818
    %v2201 = vsub.f32 %v2159, %v2193
    %v2202 = vsub.f32 %v2160, %v2194
    %v2203 = vsub.f32 %v2161, %v2195
    %v2204 = vsub.f32 %v2162, %v2196
    %v2205 = vsub.f32 %v2163, %v2197
    %v2206 = vsub.f32 %v2164, %v2198
    %v2207 = vsub.f32 %v2165, %v2199
    %v2208 = vsub.f32 %v2166, %v2200
    %v2209 = vmul.f32 %v2201, %v2201
    %v2210 = vmul.f32 %v2202, %v2202
    %v2211 = vmul.f32 %v2203, %v2203
    %v2212 = vmul.f32 %v2204, %v2204
    %v2213 = vmul.f32 %v2205, %v2205
    %v2214 = vmul.f32 %v2206, %v2206
    %v2215 = vmul.f32 %v2207, %v2207
    %v2216 = vmul.f32 %v2208, %v2208
    %v2217 = vsel %vm1793, %v2209, 0.0
    %2218 = vadd.xlane.f32.xlu0 %v2217
    %v2219 = vpop.xlane.xlu0 %2218
    %v2220 = vsel %vm1793, %v2210, 0.0
    %2221 = vadd.xlane.f32.xlu0 %v2220
    %v2222 = vpop.xlane.xlu0 %2221
    %v2223 = vsel %vm1793, %v2211, 0.0
    %2224 = vadd.xlane.f32.xlu0 %v2223
    %v2225 = vpop.xlane.xlu0 %2224
    %v2226 = vsel %vm1793, %v2212, 0.0
    %2227 = vadd.xlane.f32.xlu0 %v2226
    %v2228 = vpop.xlane.xlu0 %2227
    %v2229 = vsel %vm1793, %v2213, 0.0
    %2230 = vadd.xlane.f32.xlu0 %v2229
    %v2231 = vpop.xlane.xlu0 %2230
    %v2232 = vsel %vm1793, %v2214, 0.0
    %2233 = vadd.xlane.f32.xlu0 %v2232
    %v2234 = vpop.xlane.xlu0 %2233
    %v2235 = vsel %vm1793, %v2215, 0.0
    %2236 = vadd.xlane.f32.xlu0 %v2235
    %v2237 = vpop.xlane.xlu0 %2236
    %v2238 = vsel %vm1793, %v2216, 0.0
    %2239 = vadd.xlane.f32.xlu0 %v2238
    %v2240 = vpop.xlane.xlu0 %2239
    %v2241 = vmul.f32 %v2219, %v1818
    %v2242 = vmul.f32 %v2222, %v1818
    %v2243 = vmul.f32 %v2225, %v1818
    %v2244 = vmul.f32 %v2228, %v1818
    %v2245 = vmul.f32 %v2231, %v1818
    %v2246 = vmul.f32 %v2234, %v1818
    %v2247 = vmul.f32 %v2237, %v1818
    %v2248 = vmul.f32 %v2240, %v1818
    %v2249 = vadd.f32 %v2241, 1e-05
    %v2250 = vadd.f32 %v2242, 1e-05
    %v2251 = vadd.f32 %v2243, 1e-05
    %v2252 = vadd.f32 %v2244, 1e-05
    %v2253 = vadd.f32 %v2245, 1e-05
    %v2254 = vadd.f32 %v2246, 1e-05
    %v2255 = vadd.f32 %v2247, 1e-05
    %v2256 = vadd.f32 %v2248, 1e-05
    %v2257 = vrsqrt.pop %v2249
    %v2258 = vrsqrt.pop %v2250
    %v2259 = vrsqrt.pop %v2251
    %v2260 = vrsqrt.pop %v2252
    %v2261 = vrsqrt.pop %v2253
    %v2262 = vrsqrt.pop %v2254
    %v2263 = vrsqrt.pop %v2255
    %v2264 = vrsqrt.pop %v2256
    %v2265 = vmul.f32 %v2201, %v2257
    %v2266 = vmul.f32 %v2202, %v2258
    %v2267 = vmul.f32 %v2203, %v2259
    %v2268 = vmul.f32 %v2204, %v2260
    %v2269 = vmul.f32 %v2205, %v2261
    %v2270 = vmul.f32 %v2206, %v2262
    %v2271 = vmul.f32 %v2207, %v2263
    %v2272 = vmul.f32 %v2208, %v2264
    %v2274 = vlaneseq
    %v2275 = vshrl.u32 %v2274, 7
    %v2276 = vsub.s32 0, %v2275
    %v2277 = vrot.slane %v2167, %v2276
    %v2279 = vmul.f32 %v2265, %v2277
    %v2280 = vmul.f32 %v2266, %v2277
    %v2281 = vmul.f32 %v2267, %v2277
    %v2282 = vmul.f32 %v2268, %v2277
    %v2283 = vmul.f32 %v2269, %v2277
    %v2284 = vmul.f32 %v2270, %v2277
    %v2285 = vmul.f32 %v2271, %v2277
    %v2286 = vmul.f32 %v2272, %v2277
    %v2288 = vlaneseq
    %v2289 = vshrl.u32 %v2288, 7
    %v2290 = vsub.s32 0, %v2289
    %v2291 = vrot.slane %v2168, %v2290
    %v2293 = vadd.f32 %v2279, %v2291
    %v2294 = vadd.f32 %v2280, %v2291
    %v2295 = vadd.f32 %v2281, %v2291
    %v2296 = vadd.f32 %v2282, %v2291
    %v2297 = vadd.f32 %v2283, %v2291
    %v2298 = vadd.f32 %v2284, %v2291
    %v2299 = vadd.f32 %v2285, %v2291
    %v2300 = vadd.f32 %v2286, %v2291
    %2301 = vst.msk [vmem:[%s15] sm:$0xff] %vm1793, %v2293
    %2302 = vst.msk [vmem:[%s15 + $0x8] sm:$0xff] %vm1793, %v2294
    %2303 = vst.msk [vmem:[%s15 + $0x10] sm:$0xff] %vm1793, %v2295
    %2304 = vst.msk [vmem:[%s15 + $0x18] sm:$0xff] %vm1793, %v2296
    %2305 = vst.msk [vmem:[%s15 + $0x20] sm:$0xff] %vm1793, %v2297
    %2306 = vst.msk [vmem:[%s15 + $0x28] sm:$0xff] %vm1793, %v2298
    %2307 = vst.msk [vmem:[%s15 + $0x30] sm:$0xff] %vm1793, %v2299
    %2308 = vst.msk [vmem:[%s15 + $0x38] sm:$0xff] %vm1793, %v2300
    // Predicated region
    $region66: #{tpu_custom_call.1} parent=1 // pred_check
      _
    $region67: #{tpu_custom_call.1} parent=1 // pred_check_branch
      %2310 = sbr.rel (0) target = $region69
    $region68: #{tpu_custom_call.1} parent=1 // pred_region
      _
    $region69: #{tpu_custom_call.1} parent=1 // pred_fallthru
      _
    // Predicated region
    $region70: #{tpu_custom_call.1} parent=1 // pred_check
      _
    $region71: #{tpu_custom_call.1} parent=1 // pred_check_branch
      %2312 = sbr.rel (0) target = $region73
    $region72: #{tpu_custom_call.1} parent=1 // pred_region
      _
    $region73: #{tpu_custom_call.1} parent=1 // pred_fallthru
      _
    %2313 = vsyncpa [#allocation3], 1

</llo_original>
